<compile_context>
chip_gen: v6e
topology: v6e:2x2x1
jax: 0.10.0
libtpu: 0.0.40
codegen_flags: <defaults>
</compile_context>

<pallas_src>
import jax
import jax.numpy as jnp
import numpy as np
from jax.experimental import pallas as pl
from jax.experimental.pallas import tpu as pltpu


# ----------------------------------------------------------------------------
# In-kernel helper: 3x3 single-channel cross-correlation (pad=1) + bias + ReLU
# ----------------------------------------------------------------------------
def _conv3x3_relu(x, w_ref, b_ref, masks):
    # x     : (R, F) f32 feature map (R = B_tile*T rows folded on the sublane axis)
    # w_ref : (9,) SMEM ref, row-major 3x3 weights (torch Conv2d convention)
    # b_ref : (1,) SMEM ref
    # masks : (m_top, m_bot, m_left, m_right) (R, F) bool validity masks for reading
    #         x[t-1], x[t+1], x[., f-1], x[., f+1]; hoisted by caller, handle the
    #         per-image boundaries (zero padding).
    R, F = x.shape
    m_top, m_bot, m_left, m_right = masks

    # Row (dy) shifts: 2 sublane rolls total (XLU slot), masked across image edges.
    x_up = jnp.where(m_top, pltpu.roll(x, shift=1, axis=0), 0.0)       # x[t-1, f]
    x_dn = jnp.where(m_bot, pltpu.roll(x, shift=R - 1, axis=0), 0.0)   # x[t+1, f]

    # Per-kx weighted row sums: s[kx][t, f] = sum_ky w[ky, kx] * x[t+ky-1, f]  (VPU)
    s = [w_ref[0 * 3 + kx] * x_up + w_ref[1 * 3 + kx] * x + w_ref[2 * 3 + kx] * x_dn
         for kx in range(3)]

    # Column (dx) shifts applied ONCE to the combined sums: 2 lane rolls + 2 masks.
    left = jnp.where(m_left, pltpu.roll(s[0], shift=1, axis=1), 0.0)        # s0[t, f-1]
    right = jnp.where(m_right, pltpu.roll(s[2], shift=F - 1, axis=1), 0.0)  # s2[t, f+1]

    return jnp.maximum(left + s[1] + right + b_ref[0], 0.0)


# ----------------------------------------------------------------------------
# Fused kernel: conv1 -> ReLU -> conv2 -> ReLU -> linear head, B_tile images/step
# ----------------------------------------------------------------------------
def fused_cnn_kernel(x_ref, w1_ref, b1_ref, w2_ref, b2_ref, wl_ref, bl_ref, o_ref):
    # x_ref : (B_tile, T, F) VMEM input block
    # w1/w2 : (9,) SMEM conv weights;  b1/b2 : (1,) SMEM conv biases
    # wl_ref: (L, T, F) VMEM head weight (constant index_map -> VMEM-resident)
    # bl_ref: (1, L) VMEM head bias
    # o_ref : (B_tile, L) VMEM output block
    BT, T, F = x_ref.shape
    L = o_ref.shape[1]

    # Fold the per-step batch into the sublane axis (layout no-op: T%8==0, F%128==0).
    R = BT * T
    x = x_ref[...].reshape(R, F)

    # Per-image boundary-validity masks, built once per grid step and reused by both
    # convolutions / all taps.
    row = jax.lax.broadcasted_iota(jnp.int32, (R, F), 0)
    col = jax.lax.broadcasted_iota(jnp.int32, (R, F), 1)
    t_in = row % T
    masks = (t_in >= 1, t_in < T - 1, col >= 1, col < F - 1)

    y = _conv3x3_relu(x, w1_ref, b1_ref, masks)        # Conv2d(1,1,3,3) + ReLU
    y = _conv3x3_relu(y, w2_ref, b2_ref, masks)        # Conv2d(1,1,3,3) + ReLU

    # Linear head on the VPU (L=16 -> MXU would be >90% idle):
    #   out[b, l] = sum_{t,f} y_b[t, f] * wl[l, t, f] + bl[l]
    # Unrolled over L so the live intermediate is a few vregs (never (L,T,F)):
    # reduce T (sublane) first -> lane-dense (1, F) partials, one lane reduce at end.
    out_rows = []
    for b in range(BT):
        yb = y[b * T:(b + 1) * T, :]                                   # (T, F) static
        parts = [jnp.sum(wl_ref[l] * yb, axis=0, keepdims=True)        # (1, F) each
                 for l in range(L)]
        pmat = jnp.concatenate(parts, axis=0)                          # (L, F)
        out_rows.append(jnp.sum(pmat, axis=1) + bl_ref[0, :])          # (L,)
    o_ref[...] = jnp.stack(out_rows, axis=0)                           # (B_tile, L)


# ----------------------------------------------------------------------------
# Wrapper
# ----------------------------------------------------------------------------
def _default_batch_blocks(B):
    # v7x has 2 TensorCores/chip: keep >=2 "parallel" grid steps so both TCs run.
    # v5e/v6e are single-TC: one grid step (batch folded into sublanes) amortizes
    # the per-step pipeline overhead on this overhead-dominated kernel.
    try:
        kind = jax.devices()[0].device_kind.lower()
    except Exception:
        kind = ""
    if "v7" in kind and B >= 2 and B % 2 == 0:
        return 2
    return 1


def cnn_model_forward(x, params, *, batch_blocks=None):
    """x: (B, T, F) f32 == PyTorch (batch_size, time_frame_num, frequency_bins)."""
    B, T, F = x.shape
    L = params["b_mlp"].shape[0]
    # The roll+mask zero-padding scheme assumes the whole (T, F) image lives in one
    # unpadded block on the (sublane, lane) axes.
    assert T % 8 == 0 and F % 128 == 0, "require T % 8 == 0 and F % 128 == 0"

    if batch_blocks is None:
        batch_blocks = _default_batch_blocks(B)
    if B % batch_blocks != 0:
        batch_blocks = 1
    bt = B // batch_blocks

    # torch Linear weight (L, T*F) -> lane-dense (L, T, F): pure reshape, no copy.
    w_head = params["w_mlp"].reshape(L, T, F)

    return pl.pallas_call(
        fused_cnn_kernel,
        out_shape=jax.ShapeDtypeStruct((B, L), jnp.float32),
        grid=(batch_blocks,),
        in_specs=[
            pl.BlockSpec((bt, T, F), lambda b: (b, 0, 0)),              # x block
            pl.BlockSpec(memory_space=pltpu.MemorySpace.SMEM),          # w1 (9,)
            pl.BlockSpec(memory_space=pltpu.MemorySpace.SMEM),          # b1 (1,)
            pl.BlockSpec(memory_space=pltpu.MemorySpace.SMEM),          # w2 (9,)
            pl.BlockSpec(memory_space=pltpu.MemorySpace.SMEM),          # b2 (1,)
            pl.BlockSpec((L, T, F), lambda b: (0, 0, 0)),               # head W (resident)
            pl.BlockSpec((1, L), lambda b: (0, 0)),                     # head bias
        ],
        out_specs=pl.BlockSpec((bt, L), lambda b: (b, 0)),
        compiler_params=pltpu.CompilerParams(dimension_semantics=("parallel",)),
    )(
        x,
        params["w1"].reshape(9), params["b1"].reshape(1),
        params["w2"].reshape(9), params["b2"].reshape(1),
        w_head, params["b_mlp"].reshape(1, L),
    )


# ----------------------------------------------------------------------------
# Pure-JAX reference for correctness checking
# ----------------------------------------------------------------------------
def reference_forward(x, params):
    def conv(xc, w, b):
        out = jax.lax.conv_general_dilated(
            xc, w.reshape(1, 1, 3, 3), (1, 1), "SAME",
            dimension_numbers=("NCHW", "OIHW", "NCHW"))
        return out + b.reshape(1, 1, 1, 1)

    xc = x[:, None]                                               # (B, 1, T, F)
    y = jax.nn.relu(conv(xc, params["w1"], params["b1"]))
    y = jax.nn.relu(conv(y, params["w2"], params["b2"]))
    yf = y.reshape(y.shape[0], -1)
    return yf @ params["w_mlp"].T + params["b_mlp"]


if __name__ == "__main__":
    # Small shapes consistent with the module's forward (T x F spectrogram, 1 channel).
    B, T, F = 2, 32, 128
    LABEL_DIM = 16
    D = T * F

    key = jax.random.PRNGKey(0)
    k_x, k_w1, k_b1, k_w2, k_b2, k_wm, k_bm = jax.random.split(key, 7)

    params = {
        "w1": 0.2 * jax.random.normal(k_w1, (3, 3), jnp.float32),      # Conv2d(1,1,3,3) weight
        "b1": 0.1 * jax.random.normal(k_b1, (1,), jnp.float32),        # Conv2d bias
        "w2": 0.2 * jax.random.normal(k_w2, (3, 3), jnp.float32),
        "b2": 0.1 * jax.random.normal(k_b2, (1,), jnp.float32),
        # nn.Linear(D, label_dim) weight in torch layout (out_features, in_features).
        "w_mlp": 0.02 * jax.random.normal(k_wm, (LABEL_DIM, D), jnp.float32),
        "b_mlp": 0.1 * jax.random.normal(k_bm, (LABEL_DIM,), jnp.float32),
    }

    x = jax.random.normal(k_x, (B, T, F), jnp.float32)

    out = jax.block_until_ready(cnn_model_forward(x, params))
    ref = jax.block_until_ready(reference_forward(x, params))

    assert out.shape == (B, LABEL_DIM), out.shape
    np.testing.assert_allclose(np.asarray(out), np.asarray(ref), rtol=1e-4, atol=2e-4)

    print("KERNEL_OK")
</pallas_src>

<mosaic_0001>
module attributes {stable_mosaic.version = 11 : i64} {
  func.func @fused_cnn_kernel(%arg0: i32, %arg1: memref<2x32x128xf32, #tpu.memory_space<vmem>>, %arg2: memref<9xf32, #tpu.memory_space<smem>>, %arg3: memref<1xf32, #tpu.memory_space<smem>>, %arg4: memref<9xf32, #tpu.memory_space<smem>>, %arg5: memref<1xf32, #tpu.memory_space<smem>>, %arg6: memref<16x32x128xf32, #tpu.memory_space<vmem>>, %arg7: memref<1x16xf32, #tpu.memory_space<vmem>>, %arg8: memref<2x16xf32, #tpu.memory_space<vmem>>) attributes {dimension_semantics = [#tpu.dimension_semantics<parallel>], iteration_bounds = array<i64: 1>, scalar_prefetch = 0 : i64, scratch_operands = 0 : i64, tpu.core_type = #tpu.core_type<tc>, window_params = [{transform_indices = @transform_0, window_bounds = array<i64: 2, 32, 128>}, {transform_indices = @transform_1, window_bounds = array<i64: 9>}, {transform_indices = @transform_2, window_bounds = array<i64: 1>}, {transform_indices = @transform_3, window_bounds = array<i64: 9>}, {transform_indices = @transform_4, window_bounds = array<i64: 1>}, {pipeline_mode = #tpu.pipeline_mode<synchronous>, transform_indices = @transform_5, window_bounds = array<i64: 16, 32, 128>}, {pipeline_mode = #tpu.pipeline_mode<synchronous>, transform_indices = @transform_6, window_bounds = array<i64: 1, 16>}, {transform_indices = @transform_7, window_bounds = array<i64: 2, 16>}]} {
    %c0 = arith.constant 0 : index
    %c0_0 = arith.constant 0 : index
    %c0_1 = arith.constant 0 : index
    %0 = vector.load %arg1[%c0, %c0_0, %c0_1] : memref<2x32x128xf32, #tpu.memory_space<vmem>>, vector<2x32x128xf32>
    %1 = vector.shape_cast %0 : vector<2x32x128xf32> to vector<64x128xf32>
    %2 = tpu.iota {dimensions = array<i32: 0>} : vector<64x128xi32>
    %3 = tpu.iota {dimensions = array<i32: 1>} : vector<64x128xi32>
    %c32_i32 = arith.constant 32 : i32
    %c0_i32 = arith.constant 0 : i32
    %4 = arith.cmpi eq, %c32_i32, %c0_i32 : i32
    %c1_i32 = arith.constant 1 : i32
    %5 = arith.select %4, %c1_i32, %c32_i32 : i32
    %6 = vector.broadcast %5 : i32 to vector<64x128xi32>
    %7 = arith.remsi %2, %6 : vector<64x128xi32>
    %c0_i32_2 = arith.constant 0 : i32
    %8 = vector.broadcast %c0_i32_2 : i32 to vector<64x128xi32>
    %9 = arith.cmpi ne, %7, %8 : vector<64x128xi32>
    %c0_i32_3 = arith.constant 0 : i32
    %10 = vector.broadcast %c0_i32_3 : i32 to vector<64x128xi32>
    %11 = arith.cmpi slt, %7, %10 : vector<64x128xi32>
    %c0_i32_4 = arith.constant 0 : i32
    %12 = arith.cmpi slt, %5, %c0_i32_4 : i32
    %13 = vector.broadcast %12 : i1 to vector<64x128xi1>
    %14 = vector.broadcast %13 : vector<64x128xi1> to vector<64x128xi1>
    %15 = arith.xori %11, %14 : vector<64x128xi1>
    %16 = arith.andi %15, %9 : vector<64x128xi1>
    %17 = vector.broadcast %5 : i32 to vector<64x128xi32>
    %18 = arith.addi %7, %17 : vector<64x128xi32>
    %19 = arith.select %16, %18, %7 : vector<64x128xi1>, vector<64x128xi32>
    %c1_i32_5 = arith.constant 1 : i32
    %20 = vector.broadcast %c1_i32_5 : i32 to vector<64x128xi32>
    %21 = arith.cmpi sge, %19, %20 : vector<64x128xi32>
    %c31_i32 = arith.constant 31 : i32
    %22 = vector.broadcast %c31_i32 : i32 to vector<64x128xi32>
    %23 = arith.cmpi slt, %19, %22 : vector<64x128xi32>
    %c1_i32_6 = arith.constant 1 : i32
    %24 = vector.broadcast %c1_i32_6 : i32 to vector<64x128xi32>
    %25 = arith.cmpi sge, %3, %24 : vector<64x128xi32>
    %c127_i32 = arith.constant 127 : i32
    %26 = vector.broadcast %c127_i32 : i32 to vector<64x128xi32>
    %27 = arith.cmpi slt, %3, %26 : vector<64x128xi32>
    %c1_i32_7 = arith.constant 1 : i32
    %28 = tpu.dynamic_rotate %1 by %c1_i32_7 dim 0 : vector<64x128xf32>, i32 -> vector<64x128xf32>
    %cst = arith.constant 0.000000e+00 : f32
    %29 = vector.broadcast %cst : f32 to vector<64x128xf32>
    %30 = arith.select %21, %28, %29 : vector<64x128xi1>, vector<64x128xf32>
    %c63_i32 = arith.constant 63 : i32
    %31 = tpu.dynamic_rotate %1 by %c63_i32 dim 0 : vector<64x128xf32>, i32 -> vector<64x128xf32>
    %cst_8 = arith.constant 0.000000e+00 : f32
    %32 = vector.broadcast %cst_8 : f32 to vector<64x128xf32>
    %33 = arith.select %23, %31, %32 : vector<64x128xi1>, vector<64x128xf32>
    %c0_9 = arith.constant 0 : index
    %34 = memref.load %arg2[%c0_9] : memref<9xf32, #tpu.memory_space<smem>>
    %35 = vector.broadcast %34 : f32 to vector<64x128xf32>
    %36 = arith.mulf %35, %30 : vector<64x128xf32>
    %c3 = arith.constant 3 : index
    %37 = memref.load %arg2[%c3] : memref<9xf32, #tpu.memory_space<smem>>
    %38 = vector.broadcast %37 : f32 to vector<64x128xf32>
    %39 = arith.mulf %38, %1 : vector<64x128xf32>
    %40 = arith.addf %36, %39 : vector<64x128xf32>
    %c6 = arith.constant 6 : index
    %41 = memref.load %arg2[%c6] : memref<9xf32, #tpu.memory_space<smem>>
    %42 = vector.broadcast %41 : f32 to vector<64x128xf32>
    %43 = arith.mulf %42, %33 : vector<64x128xf32>
    %44 = arith.addf %40, %43 : vector<64x128xf32>
    %c1 = arith.constant 1 : index
    %45 = memref.load %arg2[%c1] : memref<9xf32, #tpu.memory_space<smem>>
    %46 = vector.broadcast %45 : f32 to vector<64x128xf32>
    %47 = arith.mulf %46, %30 : vector<64x128xf32>
    %c4 = arith.constant 4 : index
    %48 = memref.load %arg2[%c4] : memref<9xf32, #tpu.memory_space<smem>>
    %49 = vector.broadcast %48 : f32 to vector<64x128xf32>
    %50 = arith.mulf %49, %1 : vector<64x128xf32>
    %51 = arith.addf %47, %50 : vector<64x128xf32>
    %c7 = arith.constant 7 : index
    %52 = memref.load %arg2[%c7] : memref<9xf32, #tpu.memory_space<smem>>
    %53 = vector.broadcast %52 : f32 to vector<64x128xf32>
    %54 = arith.mulf %53, %33 : vector<64x128xf32>
    %55 = arith.addf %51, %54 : vector<64x128xf32>
    %c2 = arith.constant 2 : index
    %56 = memref.load %arg2[%c2] : memref<9xf32, #tpu.memory_space<smem>>
    %57 = vector.broadcast %56 : f32 to vector<64x128xf32>
    %58 = arith.mulf %57, %30 : vector<64x128xf32>
    %c5 = arith.constant 5 : index
    %59 = memref.load %arg2[%c5] : memref<9xf32, #tpu.memory_space<smem>>
    %60 = vector.broadcast %59 : f32 to vector<64x128xf32>
    %61 = arith.mulf %60, %1 : vector<64x128xf32>
    %62 = arith.addf %58, %61 : vector<64x128xf32>
    %c8 = arith.constant 8 : index
    %63 = memref.load %arg2[%c8] : memref<9xf32, #tpu.memory_space<smem>>
    %64 = vector.broadcast %63 : f32 to vector<64x128xf32>
    %65 = arith.mulf %64, %33 : vector<64x128xf32>
    %66 = arith.addf %62, %65 : vector<64x128xf32>
    %c1_i32_10 = arith.constant 1 : i32
    %67 = tpu.dynamic_rotate %44 by %c1_i32_10 dim 1 : vector<64x128xf32>, i32 -> vector<64x128xf32>
    %cst_11 = arith.constant 0.000000e+00 : f32
    %68 = vector.broadcast %cst_11 : f32 to vector<64x128xf32>
    %69 = arith.select %25, %67, %68 : vector<64x128xi1>, vector<64x128xf32>
    %c127_i32_12 = arith.constant 127 : i32
    %70 = tpu.dynamic_rotate %66 by %c127_i32_12 dim 1 : vector<64x128xf32>, i32 -> vector<64x128xf32>
    %cst_13 = arith.constant 0.000000e+00 : f32
    %71 = vector.broadcast %cst_13 : f32 to vector<64x128xf32>
    %72 = arith.select %27, %70, %71 : vector<64x128xi1>, vector<64x128xf32>
    %73 = arith.addf %69, %55 : vector<64x128xf32>
    %74 = arith.addf %73, %72 : vector<64x128xf32>
    %c0_14 = arith.constant 0 : index
    %75 = memref.load %arg3[%c0_14] : memref<1xf32, #tpu.memory_space<smem>>
    %76 = vector.broadcast %75 : f32 to vector<64x128xf32>
    %77 = arith.addf %74, %76 : vector<64x128xf32>
    %cst_15 = arith.constant 0.000000e+00 : f32
    %78 = vector.broadcast %cst_15 : f32 to vector<64x128xf32>
    %79 = arith.maximumf %77, %78 : vector<64x128xf32>
    %c1_i32_16 = arith.constant 1 : i32
    %80 = tpu.dynamic_rotate %79 by %c1_i32_16 dim 0 : vector<64x128xf32>, i32 -> vector<64x128xf32>
    %cst_17 = arith.constant 0.000000e+00 : f32
    %81 = vector.broadcast %cst_17 : f32 to vector<64x128xf32>
    %82 = arith.select %21, %80, %81 : vector<64x128xi1>, vector<64x128xf32>
    %c63_i32_18 = arith.constant 63 : i32
    %83 = tpu.dynamic_rotate %79 by %c63_i32_18 dim 0 : vector<64x128xf32>, i32 -> vector<64x128xf32>
    %cst_19 = arith.constant 0.000000e+00 : f32
    %84 = vector.broadcast %cst_19 : f32 to vector<64x128xf32>
    %85 = arith.select %23, %83, %84 : vector<64x128xi1>, vector<64x128xf32>
    %c0_20 = arith.constant 0 : index
    %86 = memref.load %arg4[%c0_20] : memref<9xf32, #tpu.memory_space<smem>>
    %87 = vector.broadcast %86 : f32 to vector<64x128xf32>
    %88 = arith.mulf %87, %82 : vector<64x128xf32>
    %c3_21 = arith.constant 3 : index
    %89 = memref.load %arg4[%c3_21] : memref<9xf32, #tpu.memory_space<smem>>
    %90 = vector.broadcast %89 : f32 to vector<64x128xf32>
    %91 = arith.mulf %90, %79 : vector<64x128xf32>
    %92 = arith.addf %88, %91 : vector<64x128xf32>
    %c6_22 = arith.constant 6 : index
    %93 = memref.load %arg4[%c6_22] : memref<9xf32, #tpu.memory_space<smem>>
    %94 = vector.broadcast %93 : f32 to vector<64x128xf32>
    %95 = arith.mulf %94, %85 : vector<64x128xf32>
    %96 = arith.addf %92, %95 : vector<64x128xf32>
    %c1_23 = arith.constant 1 : index
    %97 = memref.load %arg4[%c1_23] : memref<9xf32, #tpu.memory_space<smem>>
    %98 = vector.broadcast %97 : f32 to vector<64x128xf32>
    %99 = arith.mulf %98, %82 : vector<64x128xf32>
    %c4_24 = arith.constant 4 : index
    %100 = memref.load %arg4[%c4_24] : memref<9xf32, #tpu.memory_space<smem>>
    %101 = vector.broadcast %100 : f32 to vector<64x128xf32>
    %102 = arith.mulf %101, %79 : vector<64x128xf32>
    %103 = arith.addf %99, %102 : vector<64x128xf32>
    %c7_25 = arith.constant 7 : index
    %104 = memref.load %arg4[%c7_25] : memref<9xf32, #tpu.memory_space<smem>>
    %105 = vector.broadcast %104 : f32 to vector<64x128xf32>
    %106 = arith.mulf %105, %85 : vector<64x128xf32>
    %107 = arith.addf %103, %106 : vector<64x128xf32>
    %c2_26 = arith.constant 2 : index
    %108 = memref.load %arg4[%c2_26] : memref<9xf32, #tpu.memory_space<smem>>
    %109 = vector.broadcast %108 : f32 to vector<64x128xf32>
    %110 = arith.mulf %109, %82 : vector<64x128xf32>
    %c5_27 = arith.constant 5 : index
    %111 = memref.load %arg4[%c5_27] : memref<9xf32, #tpu.memory_space<smem>>
    %112 = vector.broadcast %111 : f32 to vector<64x128xf32>
    %113 = arith.mulf %112, %79 : vector<64x128xf32>
    %114 = arith.addf %110, %113 : vector<64x128xf32>
    %c8_28 = arith.constant 8 : index
    %115 = memref.load %arg4[%c8_28] : memref<9xf32, #tpu.memory_space<smem>>
    %116 = vector.broadcast %115 : f32 to vector<64x128xf32>
    %117 = arith.mulf %116, %85 : vector<64x128xf32>
    %118 = arith.addf %114, %117 : vector<64x128xf32>
    %c1_i32_29 = arith.constant 1 : i32
    %119 = tpu.dynamic_rotate %96 by %c1_i32_29 dim 1 : vector<64x128xf32>, i32 -> vector<64x128xf32>
    %cst_30 = arith.constant 0.000000e+00 : f32
    %120 = vector.broadcast %cst_30 : f32 to vector<64x128xf32>
    %121 = arith.select %25, %119, %120 : vector<64x128xi1>, vector<64x128xf32>
    %c127_i32_31 = arith.constant 127 : i32
    %122 = tpu.dynamic_rotate %118 by %c127_i32_31 dim 1 : vector<64x128xf32>, i32 -> vector<64x128xf32>
    %cst_32 = arith.constant 0.000000e+00 : f32
    %123 = vector.broadcast %cst_32 : f32 to vector<64x128xf32>
    %124 = arith.select %27, %122, %123 : vector<64x128xi1>, vector<64x128xf32>
    %125 = arith.addf %121, %107 : vector<64x128xf32>
    %126 = arith.addf %125, %124 : vector<64x128xf32>
    %c0_33 = arith.constant 0 : index
    %127 = memref.load %arg5[%c0_33] : memref<1xf32, #tpu.memory_space<smem>>
    %128 = vector.broadcast %127 : f32 to vector<64x128xf32>
    %129 = arith.addf %126, %128 : vector<64x128xf32>
    %cst_34 = arith.constant 0.000000e+00 : f32
    %130 = vector.broadcast %cst_34 : f32 to vector<64x128xf32>
    %131 = arith.maximumf %129, %130 : vector<64x128xf32>
    %132 = vector.extract_strided_slice %131 {offsets = [0, 0], sizes = [32, 128], strides = [1, 1]} : vector<64x128xf32> to vector<32x128xf32>
    %c0_35 = arith.constant 0 : index
    %c0_36 = arith.constant 0 : index
    %c0_37 = arith.constant 0 : index
    %133 = vector.load %arg6[%c0_35, %c0_36, %c0_37] : memref<16x32x128xf32, #tpu.memory_space<vmem>>, vector<1x32x128xf32>
    %134 = vector.shape_cast %133 : vector<1x32x128xf32> to vector<32x128xf32>
    %135 = arith.mulf %134, %132 : vector<32x128xf32>
    %cst_38 = arith.constant dense<0.000000e+00> : vector<128xf32>
    %136 = vector.multi_reduction <add>, %135, %cst_38 [0] : vector<32x128xf32> to vector<128xf32>
    %137 = vector.shape_cast %136 : vector<128xf32> to vector<1x128xf32>
    %c1_39 = arith.constant 1 : index
    %c0_40 = arith.constant 0 : index
    %c0_41 = arith.constant 0 : index
    %138 = vector.load %arg6[%c1_39, %c0_40, %c0_41] : memref<16x32x128xf32, #tpu.memory_space<vmem>>, vector<1x32x128xf32>
    %139 = vector.shape_cast %138 : vector<1x32x128xf32> to vector<32x128xf32>
    %140 = arith.mulf %139, %132 : vector<32x128xf32>
    %cst_42 = arith.constant dense<0.000000e+00> : vector<128xf32>
    %141 = vector.multi_reduction <add>, %140, %cst_42 [0] : vector<32x128xf32> to vector<128xf32>
    %142 = vector.shape_cast %141 : vector<128xf32> to vector<1x128xf32>
    %c2_43 = arith.constant 2 : index
    %c0_44 = arith.constant 0 : index
    %c0_45 = arith.constant 0 : index
    %143 = vector.load %arg6[%c2_43, %c0_44, %c0_45] : memref<16x32x128xf32, #tpu.memory_space<vmem>>, vector<1x32x128xf32>
    %144 = vector.shape_cast %143 : vector<1x32x128xf32> to vector<32x128xf32>
    %145 = arith.mulf %144, %132 : vector<32x128xf32>
    %cst_46 = arith.constant dense<0.000000e+00> : vector<128xf32>
    %146 = vector.multi_reduction <add>, %145, %cst_46 [0] : vector<32x128xf32> to vector<128xf32>
    %147 = vector.shape_cast %146 : vector<128xf32> to vector<1x128xf32>
    %c3_47 = arith.constant 3 : index
    %c0_48 = arith.constant 0 : index
    %c0_49 = arith.constant 0 : index
    %148 = vector.load %arg6[%c3_47, %c0_48, %c0_49] : memref<16x32x128xf32, #tpu.memory_space<vmem>>, vector<1x32x128xf32>
    %149 = vector.shape_cast %148 : vector<1x32x128xf32> to vector<32x128xf32>
    %150 = arith.mulf %149, %132 : vector<32x128xf32>
    %cst_50 = arith.constant dense<0.000000e+00> : vector<128xf32>
    %151 = vector.multi_reduction <add>, %150, %cst_50 [0] : vector<32x128xf32> to vector<128xf32>
    %152 = vector.shape_cast %151 : vector<128xf32> to vector<1x128xf32>
    %c4_51 = arith.constant 4 : index
    %c0_52 = arith.constant 0 : index
    %c0_53 = arith.constant 0 : index
    %153 = vector.load %arg6[%c4_51, %c0_52, %c0_53] : memref<16x32x128xf32, #tpu.memory_space<vmem>>, vector<1x32x128xf32>
    %154 = vector.shape_cast %153 : vector<1x32x128xf32> to vector<32x128xf32>
    %155 = arith.mulf %154, %132 : vector<32x128xf32>
    %cst_54 = arith.constant dense<0.000000e+00> : vector<128xf32>
    %156 = vector.multi_reduction <add>, %155, %cst_54 [0] : vector<32x128xf32> to vector<128xf32>
    %157 = vector.shape_cast %156 : vector<128xf32> to vector<1x128xf32>
    %c5_55 = arith.constant 5 : index
    %c0_56 = arith.constant 0 : index
    %c0_57 = arith.constant 0 : index
    %158 = vector.load %arg6[%c5_55, %c0_56, %c0_57] : memref<16x32x128xf32, #tpu.memory_space<vmem>>, vector<1x32x128xf32>
    %159 = vector.shape_cast %158 : vector<1x32x128xf32> to vector<32x128xf32>
    %160 = arith.mulf %159, %132 : vector<32x128xf32>
    %cst_58 = arith.constant dense<0.000000e+00> : vector<128xf32>
    %161 = vector.multi_reduction <add>, %160, %cst_58 [0] : vector<32x128xf32> to vector<128xf32>
    %162 = vector.shape_cast %161 : vector<128xf32> to vector<1x128xf32>
    %c6_59 = arith.constant 6 : index
    %c0_60 = arith.constant 0 : index
    %c0_61 = arith.constant 0 : index
    %163 = vector.load %arg6[%c6_59, %c0_60, %c0_61] : memref<16x32x128xf32, #tpu.memory_space<vmem>>, vector<1x32x128xf32>
    %164 = vector.shape_cast %163 : vector<1x32x128xf32> to vector<32x128xf32>
    %165 = arith.mulf %164, %132 : vector<32x128xf32>
    %cst_62 = arith.constant dense<0.000000e+00> : vector<128xf32>
    %166 = vector.multi_reduction <add>, %165, %cst_62 [0] : vector<32x128xf32> to vector<128xf32>
    %167 = vector.shape_cast %166 : vector<128xf32> to vector<1x128xf32>
    %c7_63 = arith.constant 7 : index
    %c0_64 = arith.constant 0 : index
    %c0_65 = arith.constant 0 : index
    %168 = vector.load %arg6[%c7_63, %c0_64, %c0_65] : memref<16x32x128xf32, #tpu.memory_space<vmem>>, vector<1x32x128xf32>
    %169 = vector.shape_cast %168 : vector<1x32x128xf32> to vector<32x128xf32>
    %170 = arith.mulf %169, %132 : vector<32x128xf32>
    %cst_66 = arith.constant dense<0.000000e+00> : vector<128xf32>
    %171 = vector.multi_reduction <add>, %170, %cst_66 [0] : vector<32x128xf32> to vector<128xf32>
    %172 = vector.shape_cast %171 : vector<128xf32> to vector<1x128xf32>
    %c8_67 = arith.constant 8 : index
    %c0_68 = arith.constant 0 : index
    %c0_69 = arith.constant 0 : index
    %173 = vector.load %arg6[%c8_67, %c0_68, %c0_69] : memref<16x32x128xf32, #tpu.memory_space<vmem>>, vector<1x32x128xf32>
    %174 = vector.shape_cast %173 : vector<1x32x128xf32> to vector<32x128xf32>
    %175 = arith.mulf %174, %132 : vector<32x128xf32>
    %cst_70 = arith.constant dense<0.000000e+00> : vector<128xf32>
    %176 = vector.multi_reduction <add>, %175, %cst_70 [0] : vector<32x128xf32> to vector<128xf32>
    %177 = vector.shape_cast %176 : vector<128xf32> to vector<1x128xf32>
    %c9 = arith.constant 9 : index
    %c0_71 = arith.constant 0 : index
    %c0_72 = arith.constant 0 : index
    %178 = vector.load %arg6[%c9, %c0_71, %c0_72] : memref<16x32x128xf32, #tpu.memory_space<vmem>>, vector<1x32x128xf32>
    %179 = vector.shape_cast %178 : vector<1x32x128xf32> to vector<32x128xf32>
    %180 = arith.mulf %179, %132 : vector<32x128xf32>
    %cst_73 = arith.constant dense<0.000000e+00> : vector<128xf32>
    %181 = vector.multi_reduction <add>, %180, %cst_73 [0] : vector<32x128xf32> to vector<128xf32>
    %182 = vector.shape_cast %181 : vector<128xf32> to vector<1x128xf32>
    %c10 = arith.constant 10 : index
    %c0_74 = arith.constant 0 : index
    %c0_75 = arith.constant 0 : index
    %183 = vector.load %arg6[%c10, %c0_74, %c0_75] : memref<16x32x128xf32, #tpu.memory_space<vmem>>, vector<1x32x128xf32>
    %184 = vector.shape_cast %183 : vector<1x32x128xf32> to vector<32x128xf32>
    %185 = arith.mulf %184, %132 : vector<32x128xf32>
    %cst_76 = arith.constant dense<0.000000e+00> : vector<128xf32>
    %186 = vector.multi_reduction <add>, %185, %cst_76 [0] : vector<32x128xf32> to vector<128xf32>
    %187 = vector.shape_cast %186 : vector<128xf32> to vector<1x128xf32>
    %c11 = arith.constant 11 : index
    %c0_77 = arith.constant 0 : index
    %c0_78 = arith.constant 0 : index
    %188 = vector.load %arg6[%c11, %c0_77, %c0_78] : memref<16x32x128xf32, #tpu.memory_space<vmem>>, vector<1x32x128xf32>
    %189 = vector.shape_cast %188 : vector<1x32x128xf32> to vector<32x128xf32>
    %190 = arith.mulf %189, %132 : vector<32x128xf32>
    %cst_79 = arith.constant dense<0.000000e+00> : vector<128xf32>
    %191 = vector.multi_reduction <add>, %190, %cst_79 [0] : vector<32x128xf32> to vector<128xf32>
    %192 = vector.shape_cast %191 : vector<128xf32> to vector<1x128xf32>
    %c12 = arith.constant 12 : index
    %c0_80 = arith.constant 0 : index
    %c0_81 = arith.constant 0 : index
    %193 = vector.load %arg6[%c12, %c0_80, %c0_81] : memref<16x32x128xf32, #tpu.memory_space<vmem>>, vector<1x32x128xf32>
    %194 = vector.shape_cast %193 : vector<1x32x128xf32> to vector<32x128xf32>
    %195 = arith.mulf %194, %132 : vector<32x128xf32>
    %cst_82 = arith.constant dense<0.000000e+00> : vector<128xf32>
    %196 = vector.multi_reduction <add>, %195, %cst_82 [0] : vector<32x128xf32> to vector<128xf32>
    %197 = vector.shape_cast %196 : vector<128xf32> to vector<1x128xf32>
    %c13 = arith.constant 13 : index
    %c0_83 = arith.constant 0 : index
    %c0_84 = arith.constant 0 : index
    %198 = vector.load %arg6[%c13, %c0_83, %c0_84] : memref<16x32x128xf32, #tpu.memory_space<vmem>>, vector<1x32x128xf32>
    %199 = vector.shape_cast %198 : vector<1x32x128xf32> to vector<32x128xf32>
    %200 = arith.mulf %199, %132 : vector<32x128xf32>
    %cst_85 = arith.constant dense<0.000000e+00> : vector<128xf32>
    %201 = vector.multi_reduction <add>, %200, %cst_85 [0] : vector<32x128xf32> to vector<128xf32>
    %202 = vector.shape_cast %201 : vector<128xf32> to vector<1x128xf32>
    %c14 = arith.constant 14 : index
    %c0_86 = arith.constant 0 : index
    %c0_87 = arith.constant 0 : index
    %203 = vector.load %arg6[%c14, %c0_86, %c0_87] : memref<16x32x128xf32, #tpu.memory_space<vmem>>, vector<1x32x128xf32>
    %204 = vector.shape_cast %203 : vector<1x32x128xf32> to vector<32x128xf32>
    %205 = arith.mulf %204, %132 : vector<32x128xf32>
    %cst_88 = arith.constant dense<0.000000e+00> : vector<128xf32>
    %206 = vector.multi_reduction <add>, %205, %cst_88 [0] : vector<32x128xf32> to vector<128xf32>
    %207 = vector.shape_cast %206 : vector<128xf32> to vector<1x128xf32>
    %c15 = arith.constant 15 : index
    %c0_89 = arith.constant 0 : index
    %c0_90 = arith.constant 0 : index
    %208 = vector.load %arg6[%c15, %c0_89, %c0_90] : memref<16x32x128xf32, #tpu.memory_space<vmem>>, vector<1x32x128xf32>
    %209 = vector.shape_cast %208 : vector<1x32x128xf32> to vector<32x128xf32>
    %210 = arith.mulf %209, %132 : vector<32x128xf32>
    %cst_91 = arith.constant dense<0.000000e+00> : vector<128xf32>
    %211 = vector.multi_reduction <add>, %210, %cst_91 [0] : vector<32x128xf32> to vector<128xf32>
    %212 = vector.shape_cast %211 : vector<128xf32> to vector<1x128xf32>
    %213 = tpu.concatenate %137, %142, %147, %152, %157, %162, %167, %172, %177, %182, %187, %192, %197, %202, %207, %212 in 0 : vector<1x128xf32>, vector<1x128xf32>, vector<1x128xf32>, vector<1x128xf32>, vector<1x128xf32>, vector<1x128xf32>, vector<1x128xf32>, vector<1x128xf32>, vector<1x128xf32>, vector<1x128xf32>, vector<1x128xf32>, vector<1x128xf32>, vector<1x128xf32>, vector<1x128xf32>, vector<1x128xf32>, vector<1x128xf32> -> vector<16x128xf32>
    %cst_92 = arith.constant dense<0.000000e+00> : vector<16xf32>
    %214 = vector.multi_reduction <add>, %213, %cst_92 [1] : vector<16x128xf32> to vector<16xf32>
    %c0_93 = arith.constant 0 : index
    %c0_94 = arith.constant 0 : index
    %215 = vector.load %arg7[%c0_93, %c0_94] : memref<1x16xf32, #tpu.memory_space<vmem>>, vector<1x16xf32>
    %216 = vector.shape_cast %215 : vector<1x16xf32> to vector<16xf32>
    %217 = arith.addf %214, %216 : vector<16xf32>
    %218 = vector.extract_strided_slice %131 {offsets = [32, 0], sizes = [32, 128], strides = [1, 1]} : vector<64x128xf32> to vector<32x128xf32>
    %c0_95 = arith.constant 0 : index
    %c0_96 = arith.constant 0 : index
    %c0_97 = arith.constant 0 : index
    %219 = vector.load %arg6[%c0_95, %c0_96, %c0_97] : memref<16x32x128xf32, #tpu.memory_space<vmem>>, vector<1x32x128xf32>
    %220 = vector.shape_cast %219 : vector<1x32x128xf32> to vector<32x128xf32>
    %221 = arith.mulf %220, %218 : vector<32x128xf32>
    %cst_98 = arith.constant dense<0.000000e+00> : vector<128xf32>
    %222 = vector.multi_reduction <add>, %221, %cst_98 [0] : vector<32x128xf32> to vector<128xf32>
    %223 = vector.shape_cast %222 : vector<128xf32> to vector<1x128xf32>
    %c1_99 = arith.constant 1 : index
    %c0_100 = arith.constant 0 : index
    %c0_101 = arith.constant 0 : index
    %224 = vector.load %arg6[%c1_99, %c0_100, %c0_101] : memref<16x32x128xf32, #tpu.memory_space<vmem>>, vector<1x32x128xf32>
    %225 = vector.shape_cast %224 : vector<1x32x128xf32> to vector<32x128xf32>
    %226 = arith.mulf %225, %218 : vector<32x128xf32>
    %cst_102 = arith.constant dense<0.000000e+00> : vector<128xf32>
    %227 = vector.multi_reduction <add>, %226, %cst_102 [0] : vector<32x128xf32> to vector<128xf32>
    %228 = vector.shape_cast %227 : vector<128xf32> to vector<1x128xf32>
    %c2_103 = arith.constant 2 : index
    %c0_104 = arith.constant 0 : index
    %c0_105 = arith.constant 0 : index
    %229 = vector.load %arg6[%c2_103, %c0_104, %c0_105] : memref<16x32x128xf32, #tpu.memory_space<vmem>>, vector<1x32x128xf32>
    %230 = vector.shape_cast %229 : vector<1x32x128xf32> to vector<32x128xf32>
    %231 = arith.mulf %230, %218 : vector<32x128xf32>
    %cst_106 = arith.constant dense<0.000000e+00> : vector<128xf32>
    %232 = vector.multi_reduction <add>, %231, %cst_106 [0] : vector<32x128xf32> to vector<128xf32>
    %233 = vector.shape_cast %232 : vector<128xf32> to vector<1x128xf32>
    %c3_107 = arith.constant 3 : index
    %c0_108 = arith.constant 0 : index
    %c0_109 = arith.constant 0 : index
    %234 = vector.load %arg6[%c3_107, %c0_108, %c0_109] : memref<16x32x128xf32, #tpu.memory_space<vmem>>, vector<1x32x128xf32>
    %235 = vector.shape_cast %234 : vector<1x32x128xf32> to vector<32x128xf32>
    %236 = arith.mulf %235, %218 : vector<32x128xf32>
    %cst_110 = arith.constant dense<0.000000e+00> : vector<128xf32>
    %237 = vector.multi_reduction <add>, %236, %cst_110 [0] : vector<32x128xf32> to vector<128xf32>
    %238 = vector.shape_cast %237 : vector<128xf32> to vector<1x128xf32>
    %c4_111 = arith.constant 4 : index
    %c0_112 = arith.constant 0 : index
    %c0_113 = arith.constant 0 : index
    %239 = vector.load %arg6[%c4_111, %c0_112, %c0_113] : memref<16x32x128xf32, #tpu.memory_space<vmem>>, vector<1x32x128xf32>
    %240 = vector.shape_cast %239 : vector<1x32x128xf32> to vector<32x128xf32>
    %241 = arith.mulf %240, %218 : vector<32x128xf32>
    %cst_114 = arith.constant dense<0.000000e+00> : vector<128xf32>
    %242 = vector.multi_reduction <add>, %241, %cst_114 [0] : vector<32x128xf32> to vector<128xf32>
    %243 = vector.shape_cast %242 : vector<128xf32> to vector<1x128xf32>
    %c5_115 = arith.constant 5 : index
    %c0_116 = arith.constant 0 : index
    %c0_117 = arith.constant 0 : index
    %244 = vector.load %arg6[%c5_115, %c0_116, %c0_117] : memref<16x32x128xf32, #tpu.memory_space<vmem>>, vector<1x32x128xf32>
    %245 = vector.shape_cast %244 : vector<1x32x128xf32> to vector<32x128xf32>
    %246 = arith.mulf %245, %218 : vector<32x128xf32>
    %cst_118 = arith.constant dense<0.000000e+00> : vector<128xf32>
    %247 = vector.multi_reduction <add>, %246, %cst_118 [0] : vector<32x128xf32> to vector<128xf32>
    %248 = vector.shape_cast %247 : vector<128xf32> to vector<1x128xf32>
    %c6_119 = arith.constant 6 : index
    %c0_120 = arith.constant 0 : index
    %c0_121 = arith.constant 0 : index
    %249 = vector.load %arg6[%c6_119, %c0_120, %c0_121] : memref<16x32x128xf32, #tpu.memory_space<vmem>>, vector<1x32x128xf32>
    %250 = vector.shape_cast %249 : vector<1x32x128xf32> to vector<32x128xf32>
    %251 = arith.mulf %250, %218 : vector<32x128xf32>
    %cst_122 = arith.constant dense<0.000000e+00> : vector<128xf32>
    %252 = vector.multi_reduction <add>, %251, %cst_122 [0] : vector<32x128xf32> to vector<128xf32>
    %253 = vector.shape_cast %252 : vector<128xf32> to vector<1x128xf32>
    %c7_123 = arith.constant 7 : index
    %c0_124 = arith.constant 0 : index
    %c0_125 = arith.constant 0 : index
    %254 = vector.load %arg6[%c7_123, %c0_124, %c0_125] : memref<16x32x128xf32, #tpu.memory_space<vmem>>, vector<1x32x128xf32>
    %255 = vector.shape_cast %254 : vector<1x32x128xf32> to vector<32x128xf32>
    %256 = arith.mulf %255, %218 : vector<32x128xf32>
    %cst_126 = arith.constant dense<0.000000e+00> : vector<128xf32>
    %257 = vector.multi_reduction <add>, %256, %cst_126 [0] : vector<32x128xf32> to vector<128xf32>
    %258 = vector.shape_cast %257 : vector<128xf32> to vector<1x128xf32>
    %c8_127 = arith.constant 8 : index
    %c0_128 = arith.constant 0 : index
    %c0_129 = arith.constant 0 : index
    %259 = vector.load %arg6[%c8_127, %c0_128, %c0_129] : memref<16x32x128xf32, #tpu.memory_space<vmem>>, vector<1x32x128xf32>
    %260 = vector.shape_cast %259 : vector<1x32x128xf32> to vector<32x128xf32>
    %261 = arith.mulf %260, %218 : vector<32x128xf32>
    %cst_130 = arith.constant dense<0.000000e+00> : vector<128xf32>
    %262 = vector.multi_reduction <add>, %261, %cst_130 [0] : vector<32x128xf32> to vector<128xf32>
    %263 = vector.shape_cast %262 : vector<128xf32> to vector<1x128xf32>
    %c9_131 = arith.constant 9 : index
    %c0_132 = arith.constant 0 : index
    %c0_133 = arith.constant 0 : index
    %264 = vector.load %arg6[%c9_131, %c0_132, %c0_133] : memref<16x32x128xf32, #tpu.memory_space<vmem>>, vector<1x32x128xf32>
    %265 = vector.shape_cast %264 : vector<1x32x128xf32> to vector<32x128xf32>
    %266 = arith.mulf %265, %218 : vector<32x128xf32>
    %cst_134 = arith.constant dense<0.000000e+00> : vector<128xf32>
    %267 = vector.multi_reduction <add>, %266, %cst_134 [0] : vector<32x128xf32> to vector<128xf32>
    %268 = vector.shape_cast %267 : vector<128xf32> to vector<1x128xf32>
    %c10_135 = arith.constant 10 : index
    %c0_136 = arith.constant 0 : index
    %c0_137 = arith.constant 0 : index
    %269 = vector.load %arg6[%c10_135, %c0_136, %c0_137] : memref<16x32x128xf32, #tpu.memory_space<vmem>>, vector<1x32x128xf32>
    %270 = vector.shape_cast %269 : vector<1x32x128xf32> to vector<32x128xf32>
    %271 = arith.mulf %270, %218 : vector<32x128xf32>
    %cst_138 = arith.constant dense<0.000000e+00> : vector<128xf32>
    %272 = vector.multi_reduction <add>, %271, %cst_138 [0] : vector<32x128xf32> to vector<128xf32>
    %273 = vector.shape_cast %272 : vector<128xf32> to vector<1x128xf32>
    %c11_139 = arith.constant 11 : index
    %c0_140 = arith.constant 0 : index
    %c0_141 = arith.constant 0 : index
    %274 = vector.load %arg6[%c11_139, %c0_140, %c0_141] : memref<16x32x128xf32, #tpu.memory_space<vmem>>, vector<1x32x128xf32>
    %275 = vector.shape_cast %274 : vector<1x32x128xf32> to vector<32x128xf32>
    %276 = arith.mulf %275, %218 : vector<32x128xf32>
    %cst_142 = arith.constant dense<0.000000e+00> : vector<128xf32>
    %277 = vector.multi_reduction <add>, %276, %cst_142 [0] : vector<32x128xf32> to vector<128xf32>
    %278 = vector.shape_cast %277 : vector<128xf32> to vector<1x128xf32>
    %c12_143 = arith.constant 12 : index
    %c0_144 = arith.constant 0 : index
    %c0_145 = arith.constant 0 : index
    %279 = vector.load %arg6[%c12_143, %c0_144, %c0_145] : memref<16x32x128xf32, #tpu.memory_space<vmem>>, vector<1x32x128xf32>
    %280 = vector.shape_cast %279 : vector<1x32x128xf32> to vector<32x128xf32>
    %281 = arith.mulf %280, %218 : vector<32x128xf32>
    %cst_146 = arith.constant dense<0.000000e+00> : vector<128xf32>
    %282 = vector.multi_reduction <add>, %281, %cst_146 [0] : vector<32x128xf32> to vector<128xf32>
    %283 = vector.shape_cast %282 : vector<128xf32> to vector<1x128xf32>
    %c13_147 = arith.constant 13 : index
    %c0_148 = arith.constant 0 : index
    %c0_149 = arith.constant 0 : index
    %284 = vector.load %arg6[%c13_147, %c0_148, %c0_149] : memref<16x32x128xf32, #tpu.memory_space<vmem>>, vector<1x32x128xf32>
    %285 = vector.shape_cast %284 : vector<1x32x128xf32> to vector<32x128xf32>
    %286 = arith.mulf %285, %218 : vector<32x128xf32>
    %cst_150 = arith.constant dense<0.000000e+00> : vector<128xf32>
    %287 = vector.multi_reduction <add>, %286, %cst_150 [0] : vector<32x128xf32> to vector<128xf32>
    %288 = vector.shape_cast %287 : vector<128xf32> to vector<1x128xf32>
    %c14_151 = arith.constant 14 : index
    %c0_152 = arith.constant 0 : index
    %c0_153 = arith.constant 0 : index
    %289 = vector.load %arg6[%c14_151, %c0_152, %c0_153] : memref<16x32x128xf32, #tpu.memory_space<vmem>>, vector<1x32x128xf32>
    %290 = vector.shape_cast %289 : vector<1x32x128xf32> to vector<32x128xf32>
    %291 = arith.mulf %290, %218 : vector<32x128xf32>
    %cst_154 = arith.constant dense<0.000000e+00> : vector<128xf32>
    %292 = vector.multi_reduction <add>, %291, %cst_154 [0] : vector<32x128xf32> to vector<128xf32>
    %293 = vector.shape_cast %292 : vector<128xf32> to vector<1x128xf32>
    %c15_155 = arith.constant 15 : index
    %c0_156 = arith.constant 0 : index
    %c0_157 = arith.constant 0 : index
    %294 = vector.load %arg6[%c15_155, %c0_156, %c0_157] : memref<16x32x128xf32, #tpu.memory_space<vmem>>, vector<1x32x128xf32>
    %295 = vector.shape_cast %294 : vector<1x32x128xf32> to vector<32x128xf32>
    %296 = arith.mulf %295, %218 : vector<32x128xf32>
    %cst_158 = arith.constant dense<0.000000e+00> : vector<128xf32>
    %297 = vector.multi_reduction <add>, %296, %cst_158 [0] : vector<32x128xf32> to vector<128xf32>
    %298 = vector.shape_cast %297 : vector<128xf32> to vector<1x128xf32>
    %299 = tpu.concatenate %223, %228, %233, %238, %243, %248, %253, %258, %263, %268, %273, %278, %283, %288, %293, %298 in 0 : vector<1x128xf32>, vector<1x128xf32>, vector<1x128xf32>, vector<1x128xf32>, vector<1x128xf32>, vector<1x128xf32>, vector<1x128xf32>, vector<1x128xf32>, vector<1x128xf32>, vector<1x128xf32>, vector<1x128xf32>, vector<1x128xf32>, vector<1x128xf32>, vector<1x128xf32>, vector<1x128xf32>, vector<1x128xf32> -> vector<16x128xf32>
    %cst_159 = arith.constant dense<0.000000e+00> : vector<16xf32>
    %300 = vector.multi_reduction <add>, %299, %cst_159 [1] : vector<16x128xf32> to vector<16xf32>
    %c0_160 = arith.constant 0 : index
    %c0_161 = arith.constant 0 : index
    %301 = vector.load %arg7[%c0_160, %c0_161] : memref<1x16xf32, #tpu.memory_space<vmem>>, vector<1x16xf32>
    %302 = vector.shape_cast %301 : vector<1x16xf32> to vector<16xf32>
    %303 = arith.addf %300, %302 : vector<16xf32>
    %304 = vector.shape_cast %217 : vector<16xf32> to vector<1x16xf32>
    %305 = vector.shape_cast %303 : vector<16xf32> to vector<1x16xf32>
    %306 = tpu.concatenate %304, %305 in 0 : vector<1x16xf32>, vector<1x16xf32> -> vector<2x16xf32>
    %c0_162 = arith.constant 0 : index
    %c0_163 = arith.constant 0 : index
    %307 = vector.load %arg8[%c0_162, %c0_163] : memref<2x16xf32, #tpu.memory_space<vmem>>, vector<2x16xf32>
    tpu.vector_store %arg8[%c0_162, %c0_163], %306 {strides = array<i32>} : memref<2x16xf32, #tpu.memory_space<vmem>>, vector<2x16xf32>,
    return
  }
  func.func @transform_0(%arg0: i32) -> (i32, i32, i32) {
    %c0_i32 = arith.constant 0 : i32
    %c0_i32_0 = arith.constant 0 : i32
    %c0_i32_1 = arith.constant 0 : i32
    return %arg0, %c0_i32, %c0_i32_0 : i32, i32, i32
  }
  func.func @transform_1(%arg0: i32) -> i32 {
    %c0_i32 = arith.constant 0 : i32
    %c0_i32_0 = arith.constant 0 : i32
    return %c0_i32 : i32
  }
  func.func @transform_2(%arg0: i32) -> i32 {
    %c0_i32 = arith.constant 0 : i32
    %c0_i32_0 = arith.constant 0 : i32
    return %c0_i32 : i32
  }
  func.func @transform_3(%arg0: i32) -> i32 {
    %c0_i32 = arith.constant 0 : i32
    %c0_i32_0 = arith.constant 0 : i32
    return %c0_i32 : i32
  }
  func.func @transform_4(%arg0: i32) -> i32 {
    %c0_i32 = arith.constant 0 : i32
    %c0_i32_0 = arith.constant 0 : i32
    return %c0_i32 : i32
  }
  func.func @transform_5(%arg0: i32) -> (i32, i32, i32) {
    %c0_i32 = arith.constant 0 : i32
    %c0_i32_0 = arith.constant 0 : i32
    %c0_i32_1 = arith.constant 0 : i32
    %c0_i32_2 = arith.constant 0 : i32
    return %c0_i32, %c0_i32_0, %c0_i32_1 : i32, i32, i32
  }
  func.func @transform_6(%arg0: i32) -> (i32, i32) {
    %c0_i32 = arith.constant 0 : i32
    %c0_i32_0 = arith.constant 0 : i32
    %c0_i32_1 = arith.constant 0 : i32
    return %c0_i32, %c0_i32_0 : i32, i32
  }
  func.func @transform_7(%arg0: i32) -> (i32, i32) {
    %c0_i32 = arith.constant 0 : i32
    %c0_i32_0 = arith.constant 0 : i32
    return %arg0, %c0_i32 : i32, i32
  }
}

</mosaic_0001>

<llo_original>
// kernel: tpu_custom_call.1
$region0: #{tpu_custom_call.1}
  #allocation0 [shape = 'u32[]', space=smem, size = 0x4, offset = 0x4, fixed_abs, tag = 'smem constant byte address 0x4 - core index']
  #allocation1 [shape = 'u32[144,128]{1,0:T(1,128)}', space=vmem, size = 0x12000, scoped, tag = 'internal scratch']
  #allocation2 [shape = 'f32[1]{0:T(128)S(6)}', space=smem, size = 0x200, scoped, tag = 'scoped memory for tpu_custom_call.1']
  #allocation3 [shape = 'f32[1]{0:T(128)S(6)}', space=smem, size = 0x200, scoped, tag = 'scoped memory for tpu_custom_call.1']
  %s0 = inlined_call_operand.hbm [shape: f32[2,32,128], index: 0, kind: input, shape index: {}]
  %s1 = inlined_call_operand.vmem [shape: f32[9], index: 1, kind: input, shape index: {}]
  %s2 = inlined_call_operand.<no memory space> [shape: f32[1], index: 2, kind: input, shape index: {}]
  %s3 = inlined_call_operand.vmem [shape: f32[9], index: 3, kind: input, shape index: {}]
  %s4 = inlined_call_operand.<no memory space> [shape: f32[1], index: 4, kind: input, shape index: {}]
  %s5 = inlined_call_operand.hbm [shape: f32[16,32,128], index: 5, kind: input, shape index: {}]
  %s6 = inlined_call_operand.vmem [shape: f32[1,16], index: 6, kind: input, shape index: {}]
  %s7 = inlined_call_operand.hbm [shape: f32[2,16], index: 7, kind: output, shape index: {}]
  %s8 = sld [smem:[#allocation0]]
  $region54: #{tpu_custom_call.1} parent=0
    _
  %s10 = ssub.s32 1, %s8
  %s11 = scalar_select 0, %s10, %s8
  %12 = sst [smem:[#allocation2]] %s2
  %13 = sst [smem:[#allocation3]] %s4
  $region1: #{tpu_custom_call.1} parent=0
    #allocation4 [shape = 'u8[32768]{0}', space=vmem, size = 0x8000, scoped, tag = 'input window, operand 0, single buffered']
    #allocation5 [shape = 's32[1]{0}', space=sflag, size = 0x4, scoped, tag = 'scoped memory for tpu_custom_call.1']
    #allocation6 [shape = 's32[1]{0}', space=sflag, size = 0x4, scoped, tag = 'scoped memory for tpu_custom_call.1']
    #allocation7 [shape = 's32[1]{0}', space=sflag, size = 0x4, scoped, tag = 'scoped memory for tpu_custom_call.1']
    #allocation8 [shape = 'u8[512]{0}', space=smem, size = 0x200, scoped, tag = 'input window, operand 1, single buffered']
    #allocation9 [shape = 'u8[512]{0}', space=smem, size = 0x200, scoped, tag = 'input window, operand 3, single buffered']
    #allocation10 [shape = 's32[1]{0}', space=sflag, size = 0x4, scoped, tag = 'scoped memory for tpu_custom_call.1']
    #allocation11 [shape = 'u8[262144]{0}', space=vmem, size = 0x40000, scoped, tag = 'input window, operand 5, single buffered']
    #allocation12 [shape = 's32[1]{0}', space=sflag, size = 0x4, scoped, tag = 'scoped memory for tpu_custom_call.1']
    #allocation13 [shape = 'u8[1024]{0}', space=vmem, size = 0x400, scoped, tag = 'output window, operand 0, single buffered']
    %14 = vsyncpa [#allocation5], 0
    %15 = vsyncpa [#allocation7], 0
    %16 = vsyncpa [#allocation10], 0
    %17 = vsyncpa [#allocation12], 0
    %18 = vsyncpa [#allocation6], 0
    // Predicated region
    $region2: #{tpu_custom_call.1} parent=1 // pred_check
      _
    $region3: #{tpu_custom_call.1} parent=1 // pred_check_branch
      %20 = sbr.rel (0) target = $region5
    $region4: #{tpu_custom_call.1} parent=1 // pred_region
      %s22 = ssub.s32 1024, 1024
      %23 = vsyncadd [#allocation5], %s22
      %s24 = sshll.u32 [#allocation4], 4
      %s25 = int_to_ptr.vmem [resolvable:$true] %s24
      %30 = dma.hbm_to_vmem [thread:$0]  %s0, 1024, %s25, [#allocation5], 128, 128, 8
    $region5: #{tpu_custom_call.1} parent=1 // pred_fallthru
      _
    // Predicated region
    $region6: #{tpu_custom_call.1} parent=1 // pred_check
      _
    $region7: #{tpu_custom_call.1} parent=1 // pred_check_branch
      %32 = sbr.rel (0) target = $region9
    $region8: #{tpu_custom_call.1} parent=1 // pred_region
      %s34 = ssub.s32 16, 16
      %35 = vsyncadd [#allocation7], %s34
      %s37 = sshll.u32 %s1, 4
      %s38 = int_to_ptr.vmem [resolvable:$true] %s37
      %40 = dma.vmem_to_smem %s38, 16, [#allocation8], [#allocation7]
    $region9: #{tpu_custom_call.1} parent=1 // pred_fallthru
      _
    // Predicated region
    $region10: #{tpu_custom_call.1} parent=1 // pred_check
      _
    $region11: #{tpu_custom_call.1} parent=1 // pred_check_branch
      %42 = sbr.rel (0) target = $region13
    $region12: #{tpu_custom_call.1} parent=1 // pred_region
      _
    $region13: #{tpu_custom_call.1} parent=1 // pred_fallthru
      _
    // Predicated region
    $region14: #{tpu_custom_call.1} parent=1 // pred_check
      _
    $region15: #{tpu_custom_call.1} parent=1 // pred_check_branch
      %44 = sbr.rel (0) target = $region17
    $region16: #{tpu_custom_call.1} parent=1 // pred_region
      %s46 = ssub.s32 16, 16
      %47 = vsyncadd [#allocation10], %s46
      %s49 = sshll.u32 %s3, 4
      %s50 = int_to_ptr.vmem [resolvable:$true] %s49
      %52 = dma.vmem_to_smem %s50, 16, [#allocation9], [#allocation10]
    $region17: #{tpu_custom_call.1} parent=1 // pred_fallthru
      _
    // Predicated region
    $region18: #{tpu_custom_call.1} parent=1 // pred_check
      _
    $region19: #{tpu_custom_call.1} parent=1 // pred_check_branch
      %54 = sbr.rel (0) target = $region21
    $region20: #{tpu_custom_call.1} parent=1 // pred_region
      _
    $region21: #{tpu_custom_call.1} parent=1 // pred_fallthru
      _
    // Predicated region
    $region22: #{tpu_custom_call.1} parent=1 // pred_check
      _
    $region23: #{tpu_custom_call.1} parent=1 // pred_check_branch
      %56 = sbr.rel (0) target = $region25
    $region24: #{tpu_custom_call.1} parent=1 // pred_region
      %s58 = ssub.s32 8192, 8192
      %59 = vsyncadd [#allocation12], %s58
      %s60 = sshll.u32 [#allocation11], 4
      %s61 = int_to_ptr.vmem [resolvable:$true] %s60
      %66 = dma.hbm_to_vmem [thread:$0]  %s5, 8192, %s61, [#allocation12], 128, 128, 8
    $region25: #{tpu_custom_call.1} parent=1 // pred_fallthru
      _
    // Predicated region
    $region26: #{tpu_custom_call.1} parent=1 // pred_check
      _
    $region27: #{tpu_custom_call.1} parent=1 // pred_check_branch
      %68 = sbr.rel (0) target = $region29
    $region28: #{tpu_custom_call.1} parent=1 // pred_region
      _
    $region29: #{tpu_custom_call.1} parent=1 // pred_fallthru
      _
    // Predicated region
    $region30: #{tpu_custom_call.1} parent=1 // pred_check
      _
    $region31: #{tpu_custom_call.1} parent=1 // pred_check_branch
      %70 = sbr.rel (0) target = $region33
    $region32: #{tpu_custom_call.1} parent=1 // pred_region
      %71 = dma.done [#allocation5], 1024
    $region33: #{tpu_custom_call.1} parent=1 // pred_fallthru
      _
    // Predicated region
    $region34: #{tpu_custom_call.1} parent=1 // pred_check
      _
    $region35: #{tpu_custom_call.1} parent=1 // pred_check_branch
      %73 = sbr.rel (0) target = $region37
    $region36: #{tpu_custom_call.1} parent=1 // pred_region
      %74 = dma.done [#allocation7], 16
    $region37: #{tpu_custom_call.1} parent=1 // pred_fallthru
      _
    // Predicated region
    $region38: #{tpu_custom_call.1} parent=1 // pred_check
      _
    $region39: #{tpu_custom_call.1} parent=1 // pred_check_branch
      %76 = sbr.rel (0) target = $region41
    $region40: #{tpu_custom_call.1} parent=1 // pred_region
      %77 = dma.done [#allocation10], 16
    $region41: #{tpu_custom_call.1} parent=1 // pred_fallthru
      _
    // Predicated region
    $region42: #{tpu_custom_call.1} parent=1 // pred_check
      _
    $region43: #{tpu_custom_call.1} parent=1 // pred_check_branch
      %79 = sbr.rel (0) target = $region45
    $region44: #{tpu_custom_call.1} parent=1 // pred_region
      %80 = dma.done [#allocation12], 8192
    $region45: #{tpu_custom_call.1} parent=1 // pred_fallthru
      _
    %81 = sfence
    %v82 = vld [vmem:[#allocation4] sm:$0xff]
    %v83 = vld [vmem:[#allocation4 + $0x8] sm:$0xff]
    %v84 = vld [vmem:[#allocation4 + $0x10] sm:$0xff]
    %v85 = vld [vmem:[#allocation4 + $0x18] sm:$0xff]
    %v86 = vld [vmem:[#allocation4 + $0x20] sm:$0xff]
    %v87 = vld [vmem:[#allocation4 + $0x28] sm:$0xff]
    %v88 = vld [vmem:[#allocation4 + $0x30] sm:$0xff]
    %v89 = vld [vmem:[#allocation4 + $0x38] sm:$0xff]
    %v90 = vlaneseq
    %v91 = vshrl.u32 %v90, 7
    %v92 = vadd.s32 %v91, 8
    %v93 = vadd.s32 %v91, 16
    %v94 = vadd.s32 %v91, 24
    %v95 = vadd.s32 %v91, 32
    %v96 = vadd.s32 %v91, 40
    %v97 = vadd.s32 %v91, 48
    %v98 = vadd.s32 %v91, 56
    %v99 = vlaneseq
    %v100 = vand.u32 %v99, 127
    %vm101 = vcmp.lt.s32.totalorder %v91, 0
    %v102 = vsub.s32 0, %v91
    %v103 = vsel %vm101, %v102, %v91
    %v104 = vshrl.u32 %v103, 5
    %v105 = vand.u32 %v103, 31
    %v106 = vsub.s32 0, %v105
    %v107 = vsel %vm101, %v106, %v105
    %vm108 = vcmp.lt.s32.totalorder %v92, 0
    %v109 = vsub.s32 0, %v92
    %v110 = vsel %vm108, %v109, %v92
    %v111 = vshrl.u32 %v110, 5
    %v112 = vand.u32 %v110, 31
    %v113 = vsub.s32 0, %v112
    %v114 = vsel %vm108, %v113, %v112
    %vm115 = vcmp.lt.s32.totalorder %v93, 0
    %v116 = vsub.s32 0, %v93
    %v117 = vsel %vm115, %v116, %v93
    %v118 = vshrl.u32 %v117, 5
    %v119 = vand.u32 %v117, 31
    %v120 = vsub.s32 0, %v119
    %v121 = vsel %vm115, %v120, %v119
    %vm122 = vcmp.lt.s32.totalorder %v94, 0
    %v123 = vsub.s32 0, %v94
    %v124 = vsel %vm122, %v123, %v94
    %v125 = vshrl.u32 %v124, 5
    %v126 = vand.u32 %v124, 31
    %v127 = vsub.s32 0, %v126
    %v128 = vsel %vm122, %v127, %v126
    %vm129 = vcmp.lt.s32.totalorder %v95, 0
    %v130 = vsub.s32 0, %v95
    %v131 = vsel %vm129, %v130, %v95
    %v132 = vshrl.u32 %v131, 5
    %v133 = vand.u32 %v131, 31
    %v134 = vsub.s32 0, %v133
    %v135 = vsel %vm129, %v134, %v133
    %vm136 = vcmp.lt.s32.totalorder %v96, 0
    %v137 = vsub.s32 0, %v96
    %v138 = vsel %vm136, %v137, %v96
    %v139 = vshrl.u32 %v138, 5
    %v140 = vand.u32 %v138, 31
    %v141 = vsub.s32 0, %v140
    %v142 = vsel %vm136, %v141, %v140
    %vm143 = vcmp.lt.s32.totalorder %v97, 0
    %v144 = vsub.s32 0, %v97
    %v145 = vsel %vm143, %v144, %v97
    %v146 = vshrl.u32 %v145, 5
    %v147 = vand.u32 %v145, 31
    %v148 = vsub.s32 0, %v147
    %v149 = vsel %vm143, %v148, %v147
    %vm150 = vcmp.lt.s32.totalorder %v98, 0
    %v151 = vsub.s32 0, %v98
    %v152 = vsel %vm150, %v151, %v98
    %v153 = vshrl.u32 %v152, 5
    %v154 = vand.u32 %v152, 31
    %v155 = vsub.s32 0, %v154
    %v156 = vsel %vm150, %v155, %v154
    %vm157 = vcmp.ne.s32.totalorder %v107, 0
    %vm158 = vcmp.ne.s32.totalorder %v114, 0
    %vm159 = vcmp.ne.s32.totalorder %v121, 0
    %vm160 = vcmp.ne.s32.totalorder %v128, 0
    %vm161 = vcmp.ne.s32.totalorder %v135, 0
    %vm162 = vcmp.ne.s32.totalorder %v142, 0
    %vm163 = vcmp.ne.s32.totalorder %v149, 0
    %vm164 = vcmp.ne.s32.totalorder %v156, 0
    %vm165 = vcmp.lt.s32.totalorder %v107, 0
    %vm166 = vcmp.lt.s32.totalorder %v114, 0
    %vm167 = vcmp.lt.s32.totalorder %v121, 0
    %vm168 = vcmp.lt.s32.totalorder %v128, 0
    %vm169 = vcmp.lt.s32.totalorder %v135, 0
    %vm170 = vcmp.lt.s32.totalorder %v142, 0
    %vm171 = vcmp.lt.s32.totalorder %v149, 0
    %vm172 = vcmp.lt.s32.totalorder %v156, 0
    %vm173 = vmand %vm165, %vm157
    %vm174 = vmand %vm166, %vm158
    %vm175 = vmand %vm167, %vm159
    %vm176 = vmand %vm168, %vm160
    %vm177 = vmand %vm169, %vm161
    %vm178 = vmand %vm170, %vm162
    %vm179 = vmand %vm171, %vm163
    %vm180 = vmand %vm172, %vm164
    %v181 = vadd.s32 %v107, 32
    %v182 = vadd.s32 %v114, 32
    %v183 = vadd.s32 %v121, 32
    %v184 = vadd.s32 %v128, 32
    %v185 = vadd.s32 %v135, 32
    %v186 = vadd.s32 %v142, 32
    %v187 = vadd.s32 %v149, 32
    %v188 = vadd.s32 %v156, 32
    %v189 = vsel %vm173, %v181, %v107
    %v190 = vsel %vm174, %v182, %v114
    %v191 = vsel %vm175, %v183, %v121
    %v192 = vsel %vm176, %v184, %v128
    %v193 = vsel %vm177, %v185, %v135
    %v194 = vsel %vm178, %v186, %v142
    %v195 = vsel %vm179, %v187, %v149
    %v196 = vsel %vm180, %v188, %v156
    %vm197 = vcmp.ge.s32.totalorder %v189, 1
    %vm198 = vcmp.ge.s32.totalorder %v190, 1
    %vm199 = vcmp.ge.s32.totalorder %v191, 1
    %vm200 = vcmp.ge.s32.totalorder %v192, 1
    %vm201 = vcmp.ge.s32.totalorder %v193, 1
    %vm202 = vcmp.ge.s32.totalorder %v194, 1
    %vm203 = vcmp.ge.s32.totalorder %v195, 1
    %vm204 = vcmp.ge.s32.totalorder %v196, 1
    %vm205 = vcmp.lt.s32.totalorder %v189, 31
    %vm206 = vcmp.lt.s32.totalorder %v190, 31
    %vm207 = vcmp.lt.s32.totalorder %v191, 31
    %vm208 = vcmp.lt.s32.totalorder %v192, 31
    %vm209 = vcmp.lt.s32.totalorder %v193, 31
    %vm210 = vcmp.lt.s32.totalorder %v194, 31
    %vm211 = vcmp.lt.s32.totalorder %v195, 31
    %vm212 = vcmp.lt.s32.totalorder %v196, 31
    %vm213 = vcmp.ge.s32.totalorder %v100, 1
    %vm214 = vcmp.lt.s32.totalorder %v100, 127
    %v215 = vrot.slane %v82, 7
    %v216 = vrot.slane %v83, 7
    %v217 = vrot.slane %v84, 7
    %v218 = vrot.slane %v85, 7
    %v219 = vrot.slane %v86, 7
    %v220 = vrot.slane %v87, 7
    %v221 = vrot.slane %v88, 7
    %v222 = vrot.slane %v89, 7
    %vm223 = vcmp.lt.s32.totalorder %v91, 1
    %v224 = vsel %vm223, %v221, %v222
    %v225 = vsel %vm223, %v220, %v221
    %v226 = vsel %vm223, %v219, %v220
    %v227 = vsel %vm223, %v218, %v219
    %v228 = vsel %vm223, %v217, %v218
    %v229 = vsel %vm223, %v216, %v217
    %v230 = vsel %vm223, %v215, %v216
    %v231 = vsel %vm223, %v222, %v215
    %v232 = vsel %vm197, %v231, 0.0
    %v233 = vsel %vm198, %v230, 0.0
    %v234 = vsel %vm199, %v229, 0.0
    %v235 = vsel %vm200, %v228, 0.0
    %v236 = vsel %vm201, %v227, 0.0
    %v237 = vsel %vm202, %v226, 0.0
    %v238 = vsel %vm203, %v225, 0.0
    %v239 = vsel %vm204, %v224, 0.0
    %v240 = vrot.slane %v82, 1
    %v241 = vrot.slane %v83, 1
    %v242 = vrot.slane %v84, 1
    %v243 = vrot.slane %v85, 1
    %v244 = vrot.slane %v86, 1
    %v245 = vrot.slane %v87, 1
    %v246 = vrot.slane %v88, 1
    %v247 = vrot.slane %v89, 1
    %vm248 = vcmp.lt.s32.totalorder %v91, 7
    %v249 = vsel %vm248, %v246, %v247
    %v250 = vsel %vm248, %v245, %v246
    %v251 = vsel %vm248, %v244, %v245
    %v252 = vsel %vm248, %v243, %v244
    %v253 = vsel %vm248, %v242, %v243
    %v254 = vsel %vm248, %v241, %v242
    %v255 = vsel %vm248, %v240, %v241
    %v256 = vsel %vm248, %v247, %v240
    %v257 = vsel %vm205, %v255, 0.0
    %v258 = vsel %vm206, %v254, 0.0
    %v259 = vsel %vm207, %v253, 0.0
    %v260 = vsel %vm208, %v252, 0.0
    %v261 = vsel %vm209, %v251, 0.0
    %v262 = vsel %vm210, %v250, 0.0
    %v263 = vsel %vm211, %v249, 0.0
    %v264 = vsel %vm212, %v256, 0.0
    %s265 = sld [smem:[#allocation8]]
    %v266 = vstv %s265
    %v267 = vmul.f32 %v266, %v232
    %v268 = vmul.f32 %v266, %v233
    %v269 = vmul.f32 %v266, %v234
    %v270 = vmul.f32 %v266, %v235
    %v271 = vmul.f32 %v266, %v236
    %v272 = vmul.f32 %v266, %v237
    %v273 = vmul.f32 %v266, %v238
    %v274 = vmul.f32 %v266, %v239
    %s275 = sld [smem:[#allocation8 + $0x3]]
    %v276 = vstv %s275
    %v277 = vmul.f32 %v276, %v82
    %v278 = vmul.f32 %v276, %v83
    %v279 = vmul.f32 %v276, %v84
    %v280 = vmul.f32 %v276, %v85
    %v281 = vmul.f32 %v276, %v86
    %v282 = vmul.f32 %v276, %v87
    %v283 = vmul.f32 %v276, %v88
    %v284 = vmul.f32 %v276, %v89
    %v285 = vadd.f32 %v267, %v277
    %v286 = vadd.f32 %v268, %v278
    %v287 = vadd.f32 %v269, %v279
    %v288 = vadd.f32 %v270, %v280
    %v289 = vadd.f32 %v271, %v281
    %v290 = vadd.f32 %v272, %v282
    %v291 = vadd.f32 %v273, %v283
    %v292 = vadd.f32 %v274, %v284
    %s293 = sld [smem:[#allocation8 + $0x6]]
    %v294 = vstv %s293
    %v295 = vmul.f32 %v294, %v257
    %v296 = vmul.f32 %v294, %v258
    %v297 = vmul.f32 %v294, %v259
    %v298 = vmul.f32 %v294, %v260
    %v299 = vmul.f32 %v294, %v261
    %v300 = vmul.f32 %v294, %v262
    %v301 = vmul.f32 %v294, %v263
    %v302 = vmul.f32 %v294, %v264
    %v303 = vadd.f32 %v285, %v295
    %v304 = vadd.f32 %v286, %v296
    %v305 = vadd.f32 %v287, %v297
    %v306 = vadd.f32 %v288, %v298
    %v307 = vadd.f32 %v289, %v299
    %v308 = vadd.f32 %v290, %v300
    %v309 = vadd.f32 %v291, %v301
    %v310 = vadd.f32 %v292, %v302
    %s311 = sld [smem:[#allocation8 + $0x1]]
    %v312 = vstv %s311
    %v313 = vmul.f32 %v312, %v232
    %v314 = vmul.f32 %v312, %v233
    %v315 = vmul.f32 %v312, %v234
    %v316 = vmul.f32 %v312, %v235
    %v317 = vmul.f32 %v312, %v236
    %v318 = vmul.f32 %v312, %v237
    %v319 = vmul.f32 %v312, %v238
    %v320 = vmul.f32 %v312, %v239
    %s321 = sld [smem:[#allocation8 + $0x4]]
    %v322 = vstv %s321
    %v323 = vmul.f32 %v322, %v82
    %v324 = vmul.f32 %v322, %v83
    %v325 = vmul.f32 %v322, %v84
    %v326 = vmul.f32 %v322, %v85
    %v327 = vmul.f32 %v322, %v86
    %v328 = vmul.f32 %v322, %v87
    %v329 = vmul.f32 %v322, %v88
    %v330 = vmul.f32 %v322, %v89
    %v331 = vadd.f32 %v313, %v323
    %v332 = vadd.f32 %v314, %v324
    %v333 = vadd.f32 %v315, %v325
    %v334 = vadd.f32 %v316, %v326
    %v335 = vadd.f32 %v317, %v327
    %v336 = vadd.f32 %v318, %v328
    %v337 = vadd.f32 %v319, %v329
    %v338 = vadd.f32 %v320, %v330
    %s339 = sld [smem:[#allocation8 + $0x7]]
    %v340 = vstv %s339
    %v341 = vmul.f32 %v340, %v257
    %v342 = vmul.f32 %v340, %v258
    %v343 = vmul.f32 %v340, %v259
    %v344 = vmul.f32 %v340, %v260
    %v345 = vmul.f32 %v340, %v261
    %v346 = vmul.f32 %v340, %v262
    %v347 = vmul.f32 %v340, %v263
    %v348 = vmul.f32 %v340, %v264
    %v349 = vadd.f32 %v331, %v341
    %v350 = vadd.f32 %v332, %v342
    %v351 = vadd.f32 %v333, %v343
    %v352 = vadd.f32 %v334, %v344
    %v353 = vadd.f32 %v335, %v345
    %v354 = vadd.f32 %v336, %v346
    %v355 = vadd.f32 %v337, %v347
    %v356 = vadd.f32 %v338, %v348
    %s357 = sld [smem:[#allocation8 + $0x2]]
    %v358 = vstv %s357
    %v359 = vmul.f32 %v358, %v232
    %v360 = vmul.f32 %v358, %v233
    %v361 = vmul.f32 %v358, %v234
    %v362 = vmul.f32 %v358, %v235
    %v363 = vmul.f32 %v358, %v236
    %v364 = vmul.f32 %v358, %v237
    %v365 = vmul.f32 %v358, %v238
    %v366 = vmul.f32 %v358, %v239
    %s367 = sld [smem:[#allocation8 + $0x5]]
    %v368 = vstv %s367
    %v369 = vmul.f32 %v368, %v82
    %v370 = vmul.f32 %v368, %v83
    %v371 = vmul.f32 %v368, %v84
    %v372 = vmul.f32 %v368, %v85
    %v373 = vmul.f32 %v368, %v86
    %v374 = vmul.f32 %v368, %v87
    %v375 = vmul.f32 %v368, %v88
    %v376 = vmul.f32 %v368, %v89
    %v377 = vadd.f32 %v359, %v369
    %v378 = vadd.f32 %v360, %v370
    %v379 = vadd.f32 %v361, %v371
    %v380 = vadd.f32 %v362, %v372
    %v381 = vadd.f32 %v363, %v373
    %v382 = vadd.f32 %v364, %v374
    %v383 = vadd.f32 %v365, %v375
    %v384 = vadd.f32 %v366, %v376
    %s385 = sld [smem:[#allocation8 + $0x8]]
    %v386 = vstv %s385
    %v387 = vmul.f32 %v386, %v257
    %v388 = vmul.f32 %v386, %v258
    %v389 = vmul.f32 %v386, %v259
    %v390 = vmul.f32 %v386, %v260
    %v391 = vmul.f32 %v386, %v261
    %v392 = vmul.f32 %v386, %v262
    %v393 = vmul.f32 %v386, %v263
    %v394 = vmul.f32 %v386, %v264
    %v395 = vadd.f32 %v377, %v387
    %v396 = vadd.f32 %v378, %v388
    %v397 = vadd.f32 %v379, %v389
    %v398 = vadd.f32 %v380, %v390
    %v399 = vadd.f32 %v381, %v391
    %v400 = vadd.f32 %v382, %v392
    %v401 = vadd.f32 %v383, %v393
    %v402 = vadd.f32 %v384, %v394
    %403 = vrot.lane.b32.xlu0 %v303, 1
    %v404 = vpop.permute.xlu0 %403
    %405 = vrot.lane.b32.xlu0 %v304, 1
    %v406 = vpop.permute.xlu0 %405
    %407 = vrot.lane.b32.xlu0 %v305, 1
    %v408 = vpop.permute.xlu0 %407
    %409 = vrot.lane.b32.xlu0 %v306, 1
    %v410 = vpop.permute.xlu0 %409
    %411 = vrot.lane.b32.xlu0 %v307, 1
    %v412 = vpop.permute.xlu0 %411
    %413 = vrot.lane.b32.xlu0 %v308, 1
    %v414 = vpop.permute.xlu0 %413
    %415 = vrot.lane.b32.xlu0 %v309, 1
    %v416 = vpop.permute.xlu0 %415
    %417 = vrot.lane.b32.xlu0 %v310, 1
    %v418 = vpop.permute.xlu0 %417
    %v419 = vsel %vm213, %v404, 0.0
    %v420 = vsel %vm213, %v406, 0.0
    %v421 = vsel %vm213, %v408, 0.0
    %v422 = vsel %vm213, %v410, 0.0
    %v423 = vsel %vm213, %v412, 0.0
    %v424 = vsel %vm213, %v414, 0.0
    %v425 = vsel %vm213, %v416, 0.0
    %v426 = vsel %vm213, %v418, 0.0
    %427 = vrot.lane.b32.xlu0 %v395, 127
    %v428 = vpop.permute.xlu0 %427
    %429 = vrot.lane.b32.xlu0 %v396, 127
    %v430 = vpop.permute.xlu0 %429
    %431 = vrot.lane.b32.xlu0 %v397, 127
    %v432 = vpop.permute.xlu0 %431
    %433 = vrot.lane.b32.xlu0 %v398, 127
    %v434 = vpop.permute.xlu0 %433
    %435 = vrot.lane.b32.xlu0 %v399, 127
    %v436 = vpop.permute.xlu0 %435
    %437 = vrot.lane.b32.xlu0 %v400, 127
    %v438 = vpop.permute.xlu0 %437
    %439 = vrot.lane.b32.xlu0 %v401, 127
    %v440 = vpop.permute.xlu0 %439
    %441 = vrot.lane.b32.xlu0 %v402, 127
    %v442 = vpop.permute.xlu0 %441
    %v443 = vsel %vm214, %v428, 0.0
    %v444 = vsel %vm214, %v430, 0.0
    %v445 = vsel %vm214, %v432, 0.0
    %v446 = vsel %vm214, %v434, 0.0
    %v447 = vsel %vm214, %v436, 0.0
    %v448 = vsel %vm214, %v438, 0.0
    %v449 = vsel %vm214, %v440, 0.0
    %v450 = vsel %vm214, %v442, 0.0
    %v451 = vadd.f32 %v419, %v349
    %v452 = vadd.f32 %v420, %v350
    %v453 = vadd.f32 %v421, %v351
    %v454 = vadd.f32 %v422, %v352
    %v455 = vadd.f32 %v423, %v353
    %v456 = vadd.f32 %v424, %v354
    %v457 = vadd.f32 %v425, %v355
    %v458 = vadd.f32 %v426, %v356
    %v459 = vadd.f32 %v451, %v443
    %v460 = vadd.f32 %v452, %v444
    %v461 = vadd.f32 %v453, %v445
    %v462 = vadd.f32 %v454, %v446
    %v463 = vadd.f32 %v455, %v447
    %v464 = vadd.f32 %v456, %v448
    %v465 = vadd.f32 %v457, %v449
    %v466 = vadd.f32 %v458, %v450
    %s467 = sld [smem:[#allocation2]]
    %v468 = vstv %s467
    %v469 = vadd.f32 %v459, %v468
    %v470 = vadd.f32 %v460, %v468
    %v471 = vadd.f32 %v461, %v468
    %v472 = vadd.f32 %v462, %v468
    %v473 = vadd.f32 %v463, %v468
    %v474 = vadd.f32 %v464, %v468
    %v475 = vadd.f32 %v465, %v468
    %v476 = vadd.f32 %v466, %v468
    %v477 = vmax.f32 %v469, 0.0
    %v478 = vmax.f32 %v470, 0.0
    %v479 = vmax.f32 %v471, 0.0
    %v480 = vmax.f32 %v472, 0.0
    %v481 = vmax.f32 %v473, 0.0
    %v482 = vmax.f32 %v474, 0.0
    %v483 = vmax.f32 %v475, 0.0
    %v484 = vmax.f32 %v476, 0.0
    %v485 = vrot.slane %v477, 7
    %v486 = vrot.slane %v478, 7
    %v487 = vrot.slane %v479, 7
    %v488 = vrot.slane %v480, 7
    %v489 = vrot.slane %v481, 7
    %v490 = vrot.slane %v482, 7
    %v491 = vrot.slane %v483, 7
    %v492 = vrot.slane %v484, 7
    %v493 = vsel %vm223, %v491, %v492
    %v494 = vsel %vm223, %v490, %v491
    %v495 = vsel %vm223, %v489, %v490
    %v496 = vsel %vm223, %v488, %v489
    %v497 = vsel %vm223, %v487, %v488
    %v498 = vsel %vm223, %v486, %v487
    %v499 = vsel %vm223, %v485, %v486
    %v500 = vsel %vm223, %v492, %v485
    %v501 = vsel %vm197, %v500, 0.0
    %v502 = vsel %vm198, %v499, 0.0
    %v503 = vsel %vm199, %v498, 0.0
    %v504 = vsel %vm200, %v497, 0.0
    %v505 = vsel %vm201, %v496, 0.0
    %v506 = vsel %vm202, %v495, 0.0
    %v507 = vsel %vm203, %v494, 0.0
    %v508 = vsel %vm204, %v493, 0.0
    %v509 = vrot.slane %v477, 1
    %v510 = vrot.slane %v478, 1
    %v511 = vrot.slane %v479, 1
    %v512 = vrot.slane %v480, 1
    %v513 = vrot.slane %v481, 1
    %v514 = vrot.slane %v482, 1
    %v515 = vrot.slane %v483, 1
    %v516 = vrot.slane %v484, 1
    %v517 = vsel %vm248, %v515, %v516
    %v518 = vsel %vm248, %v514, %v515
    %v519 = vsel %vm248, %v513, %v514
    %v520 = vsel %vm248, %v512, %v513
    %v521 = vsel %vm248, %v511, %v512
    %v522 = vsel %vm248, %v510, %v511
    %v523 = vsel %vm248, %v509, %v510
    %v524 = vsel %vm248, %v516, %v509
    %v525 = vsel %vm205, %v523, 0.0
    %v526 = vsel %vm206, %v522, 0.0
    %v527 = vsel %vm207, %v521, 0.0
    %v528 = vsel %vm208, %v520, 0.0
    %v529 = vsel %vm209, %v519, 0.0
    %v530 = vsel %vm210, %v518, 0.0
    %v531 = vsel %vm211, %v517, 0.0
    %v532 = vsel %vm212, %v524, 0.0
    %s533 = sld [smem:[#allocation9]]
    %v534 = vstv %s533
    %v535 = vmul.f32 %v534, %v501
    %v536 = vmul.f32 %v534, %v502
    %v537 = vmul.f32 %v534, %v503
    %v538 = vmul.f32 %v534, %v504
    %v539 = vmul.f32 %v534, %v505
    %v540 = vmul.f32 %v534, %v506
    %v541 = vmul.f32 %v534, %v507
    %v542 = vmul.f32 %v534, %v508
    %s543 = sld [smem:[#allocation9 + $0x3]]
    %v544 = vstv %s543
    %v545 = vmul.f32 %v544, %v477
    %v546 = vmul.f32 %v544, %v478
    %v547 = vmul.f32 %v544, %v479
    %v548 = vmul.f32 %v544, %v480
    %v549 = vmul.f32 %v544, %v481
    %v550 = vmul.f32 %v544, %v482
    %v551 = vmul.f32 %v544, %v483
    %v552 = vmul.f32 %v544, %v484
    %v553 = vadd.f32 %v535, %v545
    %v554 = vadd.f32 %v536, %v546
    %v555 = vadd.f32 %v537, %v547
    %v556 = vadd.f32 %v538, %v548
    %v557 = vadd.f32 %v539, %v549
    %v558 = vadd.f32 %v540, %v550
    %v559 = vadd.f32 %v541, %v551
    %v560 = vadd.f32 %v542, %v552
    %s561 = sld [smem:[#allocation9 + $0x6]]
    %v562 = vstv %s561
    %v563 = vmul.f32 %v562, %v525
    %v564 = vmul.f32 %v562, %v526
    %v565 = vmul.f32 %v562, %v527
    %v566 = vmul.f32 %v562, %v528
    %v567 = vmul.f32 %v562, %v529
    %v568 = vmul.f32 %v562, %v530
    %v569 = vmul.f32 %v562, %v531
    %v570 = vmul.f32 %v562, %v532
    %v571 = vadd.f32 %v553, %v563
    %v572 = vadd.f32 %v554, %v564
    %v573 = vadd.f32 %v555, %v565
    %v574 = vadd.f32 %v556, %v566
    %v575 = vadd.f32 %v557, %v567
    %v576 = vadd.f32 %v558, %v568
    %v577 = vadd.f32 %v559, %v569
    %v578 = vadd.f32 %v560, %v570
    %s579 = sld [smem:[#allocation9 + $0x1]]
    %v580 = vstv %s579
    %v581 = vmul.f32 %v580, %v501
    %v582 = vmul.f32 %v580, %v502
    %v583 = vmul.f32 %v580, %v503
    %v584 = vmul.f32 %v580, %v504
    %v585 = vmul.f32 %v580, %v505
    %v586 = vmul.f32 %v580, %v506
    %v587 = vmul.f32 %v580, %v507
    %v588 = vmul.f32 %v580, %v508
    %s589 = sld [smem:[#allocation9 + $0x4]]
    %v590 = vstv %s589
    %v591 = vmul.f32 %v590, %v477
    %v592 = vmul.f32 %v590, %v478
    %v593 = vmul.f32 %v590, %v479
    %v594 = vmul.f32 %v590, %v480
    %v595 = vmul.f32 %v590, %v481
    %v596 = vmul.f32 %v590, %v482
    %v597 = vmul.f32 %v590, %v483
    %v598 = vmul.f32 %v590, %v484
    %v599 = vadd.f32 %v581, %v591
    %v600 = vadd.f32 %v582, %v592
    %v601 = vadd.f32 %v583, %v593
    %v602 = vadd.f32 %v584, %v594
    %v603 = vadd.f32 %v585, %v595
    %v604 = vadd.f32 %v586, %v596
    %v605 = vadd.f32 %v587, %v597
    %v606 = vadd.f32 %v588, %v598
    %s607 = sld [smem:[#allocation9 + $0x7]]
    %v608 = vstv %s607
    %v609 = vmul.f32 %v608, %v525
    %v610 = vmul.f32 %v608, %v526
    %v611 = vmul.f32 %v608, %v527
    %v612 = vmul.f32 %v608, %v528
    %v613 = vmul.f32 %v608, %v529
    %v614 = vmul.f32 %v608, %v530
    %v615 = vmul.f32 %v608, %v531
    %v616 = vmul.f32 %v608, %v532
    %v617 = vadd.f32 %v599, %v609
    %v618 = vadd.f32 %v600, %v610
    %v619 = vadd.f32 %v601, %v611
    %v620 = vadd.f32 %v602, %v612
    %v621 = vadd.f32 %v603, %v613
    %v622 = vadd.f32 %v604, %v614
    %v623 = vadd.f32 %v605, %v615
    %v624 = vadd.f32 %v606, %v616
    %s625 = sld [smem:[#allocation9 + $0x2]]
    %v626 = vstv %s625
    %v627 = vmul.f32 %v626, %v501
    %v628 = vmul.f32 %v626, %v502
    %v629 = vmul.f32 %v626, %v503
    %v630 = vmul.f32 %v626, %v504
    %v631 = vmul.f32 %v626, %v505
    %v632 = vmul.f32 %v626, %v506
    %v633 = vmul.f32 %v626, %v507
    %v634 = vmul.f32 %v626, %v508
    %s635 = sld [smem:[#allocation9 + $0x5]]
    %v636 = vstv %s635
    %v637 = vmul.f32 %v636, %v477
    %v638 = vmul.f32 %v636, %v478
    %v639 = vmul.f32 %v636, %v479
    %v640 = vmul.f32 %v636, %v480
    %v641 = vmul.f32 %v636, %v481
    %v642 = vmul.f32 %v636, %v482
    %v643 = vmul.f32 %v636, %v483
    %v644 = vmul.f32 %v636, %v484
    %v645 = vadd.f32 %v627, %v637
    %v646 = vadd.f32 %v628, %v638
    %v647 = vadd.f32 %v629, %v639
    %v648 = vadd.f32 %v630, %v640
    %v649 = vadd.f32 %v631, %v641
    %v650 = vadd.f32 %v632, %v642
    %v651 = vadd.f32 %v633, %v643
    %v652 = vadd.f32 %v634, %v644
    %s653 = sld [smem:[#allocation9 + $0x8]]
    %v654 = vstv %s653
    %v655 = vmul.f32 %v654, %v525
    %v656 = vmul.f32 %v654, %v526
    %v657 = vmul.f32 %v654, %v527
    %v658 = vmul.f32 %v654, %v528
    %v659 = vmul.f32 %v654, %v529
    %v660 = vmul.f32 %v654, %v530
    %v661 = vmul.f32 %v654, %v531
    %v662 = vmul.f32 %v654, %v532
    %v663 = vadd.f32 %v645, %v655
    %v664 = vadd.f32 %v646, %v656
    %v665 = vadd.f32 %v647, %v657
    %v666 = vadd.f32 %v648, %v658
    %v667 = vadd.f32 %v649, %v659
    %v668 = vadd.f32 %v650, %v660
    %v669 = vadd.f32 %v651, %v661
    %v670 = vadd.f32 %v652, %v662
    %671 = vrot.lane.b32.xlu0 %v571, 1
    %v672 = vpop.permute.xlu0 %671
    %673 = vrot.lane.b32.xlu0 %v572, 1
    %v674 = vpop.permute.xlu0 %673
    %675 = vrot.lane.b32.xlu0 %v573, 1
    %v676 = vpop.permute.xlu0 %675
    %677 = vrot.lane.b32.xlu0 %v574, 1
    %v678 = vpop.permute.xlu0 %677
    %679 = vrot.lane.b32.xlu0 %v575, 1
    %v680 = vpop.permute.xlu0 %679
    %681 = vrot.lane.b32.xlu0 %v576, 1
    %v682 = vpop.permute.xlu0 %681
    %683 = vrot.lane.b32.xlu0 %v577, 1
    %v684 = vpop.permute.xlu0 %683
    %685 = vrot.lane.b32.xlu0 %v578, 1
    %v686 = vpop.permute.xlu0 %685
    %v687 = vsel %vm213, %v672, 0.0
    %v688 = vsel %vm213, %v674, 0.0
    %v689 = vsel %vm213, %v676, 0.0
    %v690 = vsel %vm213, %v678, 0.0
    %v691 = vsel %vm213, %v680, 0.0
    %v692 = vsel %vm213, %v682, 0.0
    %v693 = vsel %vm213, %v684, 0.0
    %v694 = vsel %vm213, %v686, 0.0
    %695 = vrot.lane.b32.xlu0 %v663, 127
    %v696 = vpop.permute.xlu0 %695
    %697 = vrot.lane.b32.xlu0 %v664, 127
    %v698 = vpop.permute.xlu0 %697
    %699 = vrot.lane.b32.xlu0 %v665, 127
    %v700 = vpop.permute.xlu0 %699
    %701 = vrot.lane.b32.xlu0 %v666, 127
    %v702 = vpop.permute.xlu0 %701
    %703 = vrot.lane.b32.xlu0 %v667, 127
    %v704 = vpop.permute.xlu0 %703
    %705 = vrot.lane.b32.xlu0 %v668, 127
    %v706 = vpop.permute.xlu0 %705
    %707 = vrot.lane.b32.xlu0 %v669, 127
    %v708 = vpop.permute.xlu0 %707
    %709 = vrot.lane.b32.xlu0 %v670, 127
    %v710 = vpop.permute.xlu0 %709
    %v711 = vsel %vm214, %v696, 0.0
    %v712 = vsel %vm214, %v698, 0.0
    %v713 = vsel %vm214, %v700, 0.0
    %v714 = vsel %vm214, %v702, 0.0
    %v715 = vsel %vm214, %v704, 0.0
    %v716 = vsel %vm214, %v706, 0.0
    %v717 = vsel %vm214, %v708, 0.0
    %v718 = vsel %vm214, %v710, 0.0
    %v719 = vadd.f32 %v687, %v617
    %v720 = vadd.f32 %v688, %v618
    %v721 = vadd.f32 %v689, %v619
    %v722 = vadd.f32 %v690, %v620
    %v723 = vadd.f32 %v691, %v621
    %v724 = vadd.f32 %v692, %v622
    %v725 = vadd.f32 %v693, %v623
    %v726 = vadd.f32 %v694, %v624
    %v727 = vadd.f32 %v719, %v711
    %v728 = vadd.f32 %v720, %v712
    %v729 = vadd.f32 %v721, %v713
    %v730 = vadd.f32 %v722, %v714
    %v731 = vadd.f32 %v723, %v715
    %v732 = vadd.f32 %v724, %v716
    %v733 = vadd.f32 %v725, %v717
    %v734 = vadd.f32 %v726, %v718
    %s735 = sld [smem:[#allocation3]]
    %v736 = vstv %s735
    %v737 = vadd.f32 %v727, %v736
    %v738 = vadd.f32 %v728, %v736
    %v739 = vadd.f32 %v729, %v736
    %v740 = vadd.f32 %v730, %v736
    %v741 = vadd.f32 %v731, %v736
    %v742 = vadd.f32 %v732, %v736
    %v743 = vadd.f32 %v733, %v736
    %v744 = vadd.f32 %v734, %v736
    %v745 = vmax.f32 %v737, 0.0
    %v746 = vmax.f32 %v738, 0.0
    %v747 = vmax.f32 %v739, 0.0
    %v748 = vmax.f32 %v740, 0.0
    %v749 = vmax.f32 %v741, 0.0
    %v750 = vmax.f32 %v742, 0.0
    %v751 = vmax.f32 %v743, 0.0
    %v752 = vmax.f32 %v744, 0.0
    %v753 = vld [vmem:[#allocation11] sm:$0xff]
    %v754 = vld [vmem:[#allocation11 + $0x8] sm:$0xff]
    %v755 = vld [vmem:[#allocation11 + $0x10] sm:$0xff]
    %v756 = vld [vmem:[#allocation11 + $0x18] sm:$0xff]
    %v757 = vmul.f32 %v753, %v745
    %v758 = vmul.f32 %v754, %v746
    %v759 = vmul.f32 %v755, %v747
    %v760 = vmul.f32 %v756, %v748
    %v761 = vadd.f32 %v757, %v758
    %v762 = vadd.f32 %v761, %v759
    %v763 = vadd.f32 %v762, %v760
    %v764 = vrot.slane %v763, 4
    %v765 = vadd.f32 %v763, %v764
    %v766 = vrot.slane %v765, 2
    %v767 = vadd.f32 %v765, %v766
    %v768 = vrot.slane %v767, 1
    %v769 = vadd.f32 %v767, %v768
    %s770 = scalar_lea.vmem [#allocation11], 32
    %v771 = vld [vmem:[%s770] sm:$0xff]
    %v772 = vld [vmem:[%s770 + $0x8] sm:$0xff]
    %v773 = vld [vmem:[%s770 + $0x10] sm:$0xff]
    %v774 = vld [vmem:[%s770 + $0x18] sm:$0xff]
    %v775 = vmul.f32 %v771, %v745
    %v776 = vmul.f32 %v772, %v746
    %v777 = vmul.f32 %v773, %v747
    %v778 = vmul.f32 %v774, %v748
    %v779 = vadd.f32 %v775, %v776
    %v780 = vadd.f32 %v779, %v777
    %v781 = vadd.f32 %v780, %v778
    %v782 = vrot.slane %v781, 4
    %v783 = vadd.f32 %v781, %v782
    %v784 = vrot.slane %v783, 2
    %v785 = vadd.f32 %v783, %v784
    %v786 = vrot.slane %v785, 1
    %v787 = vadd.f32 %v785, %v786
    %s788 = scalar_lea.vmem [#allocation11], 64
    %v789 = vld [vmem:[%s788] sm:$0xff]
    %v790 = vld [vmem:[%s788 + $0x8] sm:$0xff]
    %v791 = vld [vmem:[%s788 + $0x10] sm:$0xff]
    %v792 = vld [vmem:[%s788 + $0x18] sm:$0xff]
    %v793 = vmul.f32 %v789, %v745
    %v794 = vmul.f32 %v790, %v746
    %v795 = vmul.f32 %v791, %v747
    %v796 = vmul.f32 %v792, %v748
    %v797 = vadd.f32 %v793, %v794
    %v798 = vadd.f32 %v797, %v795
    %v799 = vadd.f32 %v798, %v796
    %v800 = vrot.slane %v799, 4
    %v801 = vadd.f32 %v799, %v800
    %v802 = vrot.slane %v801, 2
    %v803 = vadd.f32 %v801, %v802
    %v804 = vrot.slane %v803, 1
    %v805 = vadd.f32 %v803, %v804
    %s806 = scalar_lea.vmem [#allocation11], 96
    %v807 = vld [vmem:[%s806] sm:$0xff]
    %v808 = vld [vmem:[%s806 + $0x8] sm:$0xff]
    %v809 = vld [vmem:[%s806 + $0x10] sm:$0xff]
    %v810 = vld [vmem:[%s806 + $0x18] sm:$0xff]
    %v811 = vmul.f32 %v807, %v745
    %v812 = vmul.f32 %v808, %v746
    %v813 = vmul.f32 %v809, %v747
    %v814 = vmul.f32 %v810, %v748
    %v815 = vadd.f32 %v811, %v812
    %v816 = vadd.f32 %v815, %v813
    %v817 = vadd.f32 %v816, %v814
    %v818 = vrot.slane %v817, 4
    %v819 = vadd.f32 %v817, %v818
    %v820 = vrot.slane %v819, 2
    %v821 = vadd.f32 %v819, %v820
    %v822 = vrot.slane %v821, 1
    %v823 = vadd.f32 %v821, %v822
    %s824 = scalar_lea.vmem [#allocation11], 128
    %v825 = vld [vmem:[%s824] sm:$0xff]
    %v826 = vld [vmem:[%s824 + $0x8] sm:$0xff]
    %v827 = vld [vmem:[%s824 + $0x10] sm:$0xff]
    %v828 = vld [vmem:[%s824 + $0x18] sm:$0xff]
    %v829 = vmul.f32 %v825, %v745
    %v830 = vmul.f32 %v826, %v746
    %v831 = vmul.f32 %v827, %v747
    %v832 = vmul.f32 %v828, %v748
    %v833 = vadd.f32 %v829, %v830
    %v834 = vadd.f32 %v833, %v831
    %v835 = vadd.f32 %v834, %v832
    %v836 = vrot.slane %v835, 4
    %v837 = vadd.f32 %v835, %v836
    %v838 = vrot.slane %v837, 2
    %v839 = vadd.f32 %v837, %v838
    %v840 = vrot.slane %v839, 1
    %v841 = vadd.f32 %v839, %v840
    %s842 = scalar_lea.vmem [#allocation11], 160
    %v843 = vld [vmem:[%s842] sm:$0xff]
    %v844 = vld [vmem:[%s842 + $0x8] sm:$0xff]
    %v845 = vld [vmem:[%s842 + $0x10] sm:$0xff]
    %v846 = vld [vmem:[%s842 + $0x18] sm:$0xff]
    %v847 = vmul.f32 %v843, %v745
    %v848 = vmul.f32 %v844, %v746
    %v849 = vmul.f32 %v845, %v747
    %v850 = vmul.f32 %v846, %v748
    %v851 = vadd.f32 %v847, %v848
    %v852 = vadd.f32 %v851, %v849
    %v853 = vadd.f32 %v852, %v850
    %v854 = vrot.slane %v853, 4
    %v855 = vadd.f32 %v853, %v854
    %v856 = vrot.slane %v855, 2
    %v857 = vadd.f32 %v855, %v856
    %v858 = vrot.slane %v857, 1
    %v859 = vadd.f32 %v857, %v858
    %s860 = scalar_lea.vmem [#allocation11], 192
    %v861 = vld [vmem:[%s860] sm:$0xff]
    %v862 = vld [vmem:[%s860 + $0x8] sm:$0xff]
    %v863 = vld [vmem:[%s860 + $0x10] sm:$0xff]
    %v864 = vld [vmem:[%s860 + $0x18] sm:$0xff]
    %v865 = vmul.f32 %v861, %v745
    %v866 = vmul.f32 %v862, %v746
    %v867 = vmul.f32 %v863, %v747
    %v868 = vmul.f32 %v864, %v748
    %v869 = vadd.f32 %v865, %v866
    %v870 = vadd.f32 %v869, %v867
    %v871 = vadd.f32 %v870, %v868
    %v872 = vrot.slane %v871, 4
    %v873 = vadd.f32 %v871, %v872
    %v874 = vrot.slane %v873, 2
    %v875 = vadd.f32 %v873, %v874
    %v876 = vrot.slane %v875, 1
    %v877 = vadd.f32 %v875, %v876
    %s878 = scalar_lea.vmem [#allocation11], 224
    %v879 = vld [vmem:[%s878] sm:$0xff]
    %v880 = vld [vmem:[%s878 + $0x8] sm:$0xff]
    %v881 = vld [vmem:[%s878 + $0x10] sm:$0xff]
    %v882 = vld [vmem:[%s878 + $0x18] sm:$0xff]
    %v883 = vmul.f32 %v879, %v745
    %v884 = vmul.f32 %v880, %v746
    %v885 = vmul.f32 %v881, %v747
    %v886 = vmul.f32 %v882, %v748
    %v887 = vadd.f32 %v883, %v884
    %v888 = vadd.f32 %v887, %v885
    %v889 = vadd.f32 %v888, %v886
    %v890 = vrot.slane %v889, 4
    %v891 = vadd.f32 %v889, %v890
    %v892 = vrot.slane %v891, 2
    %v893 = vadd.f32 %v891, %v892
    %v894 = vrot.slane %v893, 1
    %v895 = vadd.f32 %v893, %v894
    %s896 = scalar_lea.vmem [#allocation11], 256
    %v897 = vld [vmem:[%s896] sm:$0xff]
    %v898 = vld [vmem:[%s896 + $0x8] sm:$0xff]
    %v899 = vld [vmem:[%s896 + $0x10] sm:$0xff]
    %v900 = vld [vmem:[%s896 + $0x18] sm:$0xff]
    %v901 = vmul.f32 %v897, %v745
    %v902 = vmul.f32 %v898, %v746
    %v903 = vmul.f32 %v899, %v747
    %v904 = vmul.f32 %v900, %v748
    %v905 = vadd.f32 %v901, %v902
    %v906 = vadd.f32 %v905, %v903
    %v907 = vadd.f32 %v906, %v904
    %v908 = vrot.slane %v907, 4
    %v909 = vadd.f32 %v907, %v908
    %v910 = vrot.slane %v909, 2
    %v911 = vadd.f32 %v909, %v910
    %v912 = vrot.slane %v911, 1
    %v913 = vadd.f32 %v911, %v912
    %s914 = scalar_lea.vmem [#allocation11], 288
    %v915 = vld [vmem:[%s914] sm:$0xff]
    %v916 = vld [vmem:[%s914 + $0x8] sm:$0xff]
    %v917 = vld [vmem:[%s914 + $0x10] sm:$0xff]
    %v918 = vld [vmem:[%s914 + $0x18] sm:$0xff]
    %v919 = vmul.f32 %v915, %v745
    %v920 = vmul.f32 %v916, %v746
    %v921 = vmul.f32 %v917, %v747
    %v922 = vmul.f32 %v918, %v748
    %v923 = vadd.f32 %v919, %v920
    %v924 = vadd.f32 %v923, %v921
    %v925 = vadd.f32 %v924, %v922
    %v926 = vrot.slane %v925, 4
    %v927 = vadd.f32 %v925, %v926
    %v928 = vrot.slane %v927, 2
    %v929 = vadd.f32 %v927, %v928
    %v930 = vrot.slane %v929, 1
    %v931 = vadd.f32 %v929, %v930
    %s932 = scalar_lea.vmem [#allocation11], 320
    %v933 = vld [vmem:[%s932] sm:$0xff]
    %v934 = vld [vmem:[%s932 + $0x8] sm:$0xff]
    %v935 = vld [vmem:[%s932 + $0x10] sm:$0xff]
    %v936 = vld [vmem:[%s932 + $0x18] sm:$0xff]
    %v937 = vmul.f32 %v933, %v745
    %v938 = vmul.f32 %v934, %v746
    %v939 = vmul.f32 %v935, %v747
    %v940 = vmul.f32 %v936, %v748
    %v941 = vadd.f32 %v937, %v938
    %v942 = vadd.f32 %v941, %v939
    %v943 = vadd.f32 %v942, %v940
    %v944 = vrot.slane %v943, 4
    %v945 = vadd.f32 %v943, %v944
    %v946 = vrot.slane %v945, 2
    %v947 = vadd.f32 %v945, %v946
    %v948 = vrot.slane %v947, 1
    %v949 = vadd.f32 %v947, %v948
    %s950 = scalar_lea.vmem [#allocation11], 352
    %v951 = vld [vmem:[%s950] sm:$0xff]
    %v952 = vld [vmem:[%s950 + $0x8] sm:$0xff]
    %v953 = vld [vmem:[%s950 + $0x10] sm:$0xff]
    %v954 = vld [vmem:[%s950 + $0x18] sm:$0xff]
    %v955 = vmul.f32 %v951, %v745
    %v956 = vmul.f32 %v952, %v746
    %v957 = vmul.f32 %v953, %v747
    %v958 = vmul.f32 %v954, %v748
    %v959 = vadd.f32 %v955, %v956
    %v960 = vadd.f32 %v959, %v957
    %v961 = vadd.f32 %v960, %v958
    %v962 = vrot.slane %v961, 4
    %v963 = vadd.f32 %v961, %v962
    %v964 = vrot.slane %v963, 2
    %v965 = vadd.f32 %v963, %v964
    %v966 = vrot.slane %v965, 1
    %v967 = vadd.f32 %v965, %v966
    %s968 = scalar_lea.vmem [#allocation11], 384
    %v969 = vld [vmem:[%s968] sm:$0xff]
    %v970 = vld [vmem:[%s968 + $0x8] sm:$0xff]
    %v971 = vld [vmem:[%s968 + $0x10] sm:$0xff]
    %v972 = vld [vmem:[%s968 + $0x18] sm:$0xff]
    %v973 = vmul.f32 %v969, %v745
    %v974 = vmul.f32 %v970, %v746
    %v975 = vmul.f32 %v971, %v747
    %v976 = vmul.f32 %v972, %v748
    %v977 = vadd.f32 %v973, %v974
    %v978 = vadd.f32 %v977, %v975
    %v979 = vadd.f32 %v978, %v976
    %v980 = vrot.slane %v979, 4
    %v981 = vadd.f32 %v979, %v980
    %v982 = vrot.slane %v981, 2
    %v983 = vadd.f32 %v981, %v982
    %v984 = vrot.slane %v983, 1
    %v985 = vadd.f32 %v983, %v984
    %s986 = scalar_lea.vmem [#allocation11], 416
    %v987 = vld [vmem:[%s986] sm:$0xff]
    %v988 = vld [vmem:[%s986 + $0x8] sm:$0xff]
    %v989 = vld [vmem:[%s986 + $0x10] sm:$0xff]
    %v990 = vld [vmem:[%s986 + $0x18] sm:$0xff]
    %v991 = vmul.f32 %v987, %v745
    %v992 = vmul.f32 %v988, %v746
    %v993 = vmul.f32 %v989, %v747
    %v994 = vmul.f32 %v990, %v748
    %v995 = vadd.f32 %v991, %v992
    %v996 = vadd.f32 %v995, %v993
    %v997 = vadd.f32 %v996, %v994
    %v998 = vrot.slane %v997, 4
    %v999 = vadd.f32 %v997, %v998
    %v1000 = vrot.slane %v999, 2
    %v1001 = vadd.f32 %v999, %v1000
    %v1002 = vrot.slane %v1001, 1
    %v1003 = vadd.f32 %v1001, %v1002
    %s1004 = scalar_lea.vmem [#allocation11], 448
    %v1005 = vld [vmem:[%s1004] sm:$0xff]
    %v1006 = vld [vmem:[%s1004 + $0x8] sm:$0xff]
    %v1007 = vld [vmem:[%s1004 + $0x10] sm:$0xff]
    %v1008 = vld [vmem:[%s1004 + $0x18] sm:$0xff]
    %v1009 = vmul.f32 %v1005, %v745
    %v1010 = vmul.f32 %v1006, %v746
    %v1011 = vmul.f32 %v1007, %v747
    %v1012 = vmul.f32 %v1008, %v748
    %v1013 = vadd.f32 %v1009, %v1010
    %v1014 = vadd.f32 %v1013, %v1011
    %v1015 = vadd.f32 %v1014, %v1012
    %v1016 = vrot.slane %v1015, 4
    %v1017 = vadd.f32 %v1015, %v1016
    %v1018 = vrot.slane %v1017, 2
    %v1019 = vadd.f32 %v1017, %v1018
    %v1020 = vrot.slane %v1019, 1
    %v1021 = vadd.f32 %v1019, %v1020
    %s1022 = scalar_lea.vmem [#allocation11], 480
    %v1023 = vld [vmem:[%s1022] sm:$0xff]
    %v1024 = vld [vmem:[%s1022 + $0x8] sm:$0xff]
    %v1025 = vld [vmem:[%s1022 + $0x10] sm:$0xff]
    %v1026 = vld [vmem:[%s1022 + $0x18] sm:$0xff]
    %v1027 = vmul.f32 %v1023, %v745
    %v1028 = vmul.f32 %v1024, %v746
    %v1029 = vmul.f32 %v1025, %v747
    %v1030 = vmul.f32 %v1026, %v748
    %v1031 = vadd.f32 %v1027, %v1028
    %v1032 = vadd.f32 %v1031, %v1029
    %v1033 = vadd.f32 %v1032, %v1030
    %v1034 = vrot.slane %v1033, 4
    %v1035 = vadd.f32 %v1033, %v1034
    %v1036 = vrot.slane %v1035, 2
    %v1037 = vadd.f32 %v1035, %v1036
    %v1038 = vrot.slane %v1037, 1
    %v1039 = vadd.f32 %v1037, %v1038
    %vm1040 = vcmask 1040384
    %v1041 = vsel %vm1040, %v769, %v787
    %vm1042 = vcmask 1041408
    %v1043 = vsel %vm1042, %v1041, %v805
    %vm1044 = vcmask 1042432
    %v1045 = vsel %vm1044, %v1043, %v823
    %vm1046 = vcmask 1043456
    %v1047 = vsel %vm1046, %v1045, %v841
    %vm1048 = vcmask 1044480
    %v1049 = vsel %vm1048, %v1047, %v859
    %vm1050 = vcmask 1045504
    %v1051 = vsel %vm1050, %v1049, %v877
    %vm1052 = vcmask 1046528
    %v1053 = vsel %vm1052, %v1051, %v895
    %v1054 = vsel %vm1040, %v913, %v931
    %v1055 = vsel %vm1042, %v1054, %v949
    %v1056 = vsel %vm1044, %v1055, %v967
    %v1057 = vsel %vm1046, %v1056, %v985
    %v1058 = vsel %vm1048, %v1057, %v1003
    %v1059 = vsel %vm1050, %v1058, %v1021
    %v1060 = vsel %vm1052, %v1059, %v1039
    %1061 = vadd.xlane.f32.xlu0 %v1053
    %v1062 = vpop.xlane.xlu0 %1061
    %1063 = vadd.xlane.f32.xlu0 %v1060
    %v1064 = vpop.xlane.xlu0 %1063
    %v1065 = vld [vmem:[%s6] sm:$0x1]
    %v1067 = vlaneseq
    %v1068 = vshrl.u32 %v1067, 7
    %v1069 = vsub.s32 0, %v1068
    %v1070 = vrot.slane %v1065, %v1069
    %1072 = vbcast.lane.b32.xlu0 %v1070, 256
    %v1073 = vpop.permute.xlu0 %1072
    %s1075 = sor.u32 256, 8
    %1076 = vbcast.lane.b32.xlu0 %v1070, %s1075
    %v1077 = vpop.permute.xlu0 %1076
    %v1080 = vadd.f32 %v1062, %v1073
    %v1081 = vadd.f32 %v1064, %v1077
    %v1082 = vmul.f32 %v753, %v749
    %v1083 = vmul.f32 %v754, %v750
    %v1084 = vmul.f32 %v755, %v751
    %v1085 = vmul.f32 %v756, %v752
    %v1086 = vadd.f32 %v1082, %v1083
    %v1087 = vadd.f32 %v1086, %v1084
    %v1088 = vadd.f32 %v1087, %v1085
    %v1089 = vrot.slane %v1088, 4
    %v1090 = vadd.f32 %v1088, %v1089
    %v1091 = vrot.slane %v1090, 2
    %v1092 = vadd.f32 %v1090, %v1091
    %v1093 = vrot.slane %v1092, 1
    %v1094 = vadd.f32 %v1092, %v1093
    %v1095 = vmul.f32 %v771, %v749
    %v1096 = vmul.f32 %v772, %v750
    %v1097 = vmul.f32 %v773, %v751
    %v1098 = vmul.f32 %v774, %v752
    %v1099 = vadd.f32 %v1095, %v1096
    %v1100 = vadd.f32 %v1099, %v1097
    %v1101 = vadd.f32 %v1100, %v1098
    %v1102 = vrot.slane %v1101, 4
    %v1103 = vadd.f32 %v1101, %v1102
    %v1104 = vrot.slane %v1103, 2
    %v1105 = vadd.f32 %v1103, %v1104
    %v1106 = vrot.slane %v1105, 1
    %v1107 = vadd.f32 %v1105, %v1106
    %v1108 = vmul.f32 %v789, %v749
    %v1109 = vmul.f32 %v790, %v750
    %v1110 = vmul.f32 %v791, %v751
    %v1111 = vmul.f32 %v792, %v752
    %v1112 = vadd.f32 %v1108, %v1109
    %v1113 = vadd.f32 %v1112, %v1110
    %v1114 = vadd.f32 %v1113, %v1111
    %v1115 = vrot.slane %v1114, 4
    %v1116 = vadd.f32 %v1114, %v1115
    %v1117 = vrot.slane %v1116, 2
    %v1118 = vadd.f32 %v1116, %v1117
    %v1119 = vrot.slane %v1118, 1
    %v1120 = vadd.f32 %v1118, %v1119
    %v1121 = vmul.f32 %v807, %v749
    %v1122 = vmul.f32 %v808, %v750
    %v1123 = vmul.f32 %v809, %v751
    %v1124 = vmul.f32 %v810, %v752
    %v1125 = vadd.f32 %v1121, %v1122
    %v1126 = vadd.f32 %v1125, %v1123
    %v1127 = vadd.f32 %v1126, %v1124
    %v1128 = vrot.slane %v1127, 4
    %v1129 = vadd.f32 %v1127, %v1128
    %v1130 = vrot.slane %v1129, 2
    %v1131 = vadd.f32 %v1129, %v1130
    %v1132 = vrot.slane %v1131, 1
    %v1133 = vadd.f32 %v1131, %v1132
    %v1134 = vmul.f32 %v825, %v749
    %v1135 = vmul.f32 %v826, %v750
    %v1136 = vmul.f32 %v827, %v751
    %v1137 = vmul.f32 %v828, %v752
    %v1138 = vadd.f32 %v1134, %v1135
    %v1139 = vadd.f32 %v1138, %v1136
    %v1140 = vadd.f32 %v1139, %v1137
    %v1141 = vrot.slane %v1140, 4
    %v1142 = vadd.f32 %v1140, %v1141
    %v1143 = vrot.slane %v1142, 2
    %v1144 = vadd.f32 %v1142, %v1143
    %v1145 = vrot.slane %v1144, 1
    %v1146 = vadd.f32 %v1144, %v1145
    %v1147 = vmul.f32 %v843, %v749
    %v1148 = vmul.f32 %v844, %v750
    %v1149 = vmul.f32 %v845, %v751
    %v1150 = vmul.f32 %v846, %v752
    %v1151 = vadd.f32 %v1147, %v1148
    %v1152 = vadd.f32 %v1151, %v1149
    %v1153 = vadd.f32 %v1152, %v1150
    %v1154 = vrot.slane %v1153, 4
    %v1155 = vadd.f32 %v1153, %v1154
    %v1156 = vrot.slane %v1155, 2
    %v1157 = vadd.f32 %v1155, %v1156
    %v1158 = vrot.slane %v1157, 1
    %v1159 = vadd.f32 %v1157, %v1158
    %v1160 = vmul.f32 %v861, %v749
    %v1161 = vmul.f32 %v862, %v750
    %v1162 = vmul.f32 %v863, %v751
    %v1163 = vmul.f32 %v864, %v752
    %v1164 = vadd.f32 %v1160, %v1161
    %v1165 = vadd.f32 %v1164, %v1162
    %v1166 = vadd.f32 %v1165, %v1163
    %v1167 = vrot.slane %v1166, 4
    %v1168 = vadd.f32 %v1166, %v1167
    %v1169 = vrot.slane %v1168, 2
    %v1170 = vadd.f32 %v1168, %v1169
    %v1171 = vrot.slane %v1170, 1
    %v1172 = vadd.f32 %v1170, %v1171
    %v1173 = vmul.f32 %v879, %v749
    %v1174 = vmul.f32 %v880, %v750
    %v1175 = vmul.f32 %v881, %v751
    %v1176 = vmul.f32 %v882, %v752
    %v1177 = vadd.f32 %v1173, %v1174
    %v1178 = vadd.f32 %v1177, %v1175
    %v1179 = vadd.f32 %v1178, %v1176
    %v1180 = vrot.slane %v1179, 4
    %v1181 = vadd.f32 %v1179, %v1180
    %v1182 = vrot.slane %v1181, 2
    %v1183 = vadd.f32 %v1181, %v1182
    %v1184 = vrot.slane %v1183, 1
    %v1185 = vadd.f32 %v1183, %v1184
    %v1186 = vmul.f32 %v897, %v749
    %v1187 = vmul.f32 %v898, %v750
    %v1188 = vmul.f32 %v899, %v751
    %v1189 = vmul.f32 %v900, %v752
    %v1190 = vadd.f32 %v1186, %v1187
    %v1191 = vadd.f32 %v1190, %v1188
    %v1192 = vadd.f32 %v1191, %v1189
    %v1193 = vrot.slane %v1192, 4
    %v1194 = vadd.f32 %v1192, %v1193
    %v1195 = vrot.slane %v1194, 2
    %v1196 = vadd.f32 %v1194, %v1195
    %v1197 = vrot.slane %v1196, 1
    %v1198 = vadd.f32 %v1196, %v1197
    %v1199 = vmul.f32 %v915, %v749
    %v1200 = vmul.f32 %v916, %v750
    %v1201 = vmul.f32 %v917, %v751
    %v1202 = vmul.f32 %v918, %v752
    %v1203 = vadd.f32 %v1199, %v1200
    %v1204 = vadd.f32 %v1203, %v1201
    %v1205 = vadd.f32 %v1204, %v1202
    %v1206 = vrot.slane %v1205, 4
    %v1207 = vadd.f32 %v1205, %v1206
    %v1208 = vrot.slane %v1207, 2
    %v1209 = vadd.f32 %v1207, %v1208
    %v1210 = vrot.slane %v1209, 1
    %v1211 = vadd.f32 %v1209, %v1210
    %v1212 = vmul.f32 %v933, %v749
    %v1213 = vmul.f32 %v934, %v750
    %v1214 = vmul.f32 %v935, %v751
    %v1215 = vmul.f32 %v936, %v752
    %v1216 = vadd.f32 %v1212, %v1213
    %v1217 = vadd.f32 %v1216, %v1214
    %v1218 = vadd.f32 %v1217, %v1215
    %v1219 = vrot.slane %v1218, 4
    %v1220 = vadd.f32 %v1218, %v1219
    %v1221 = vrot.slane %v1220, 2
    %v1222 = vadd.f32 %v1220, %v1221
    %v1223 = vrot.slane %v1222, 1
    %v1224 = vadd.f32 %v1222, %v1223
    %v1225 = vmul.f32 %v951, %v749
    %v1226 = vmul.f32 %v952, %v750
    %v1227 = vmul.f32 %v953, %v751
    %v1228 = vmul.f32 %v954, %v752
    %v1229 = vadd.f32 %v1225, %v1226
    %v1230 = vadd.f32 %v1229, %v1227
    %v1231 = vadd.f32 %v1230, %v1228
    %v1232 = vrot.slane %v1231, 4
    %v1233 = vadd.f32 %v1231, %v1232
    %v1234 = vrot.slane %v1233, 2
    %v1235 = vadd.f32 %v1233, %v1234
    %v1236 = vrot.slane %v1235, 1
    %v1237 = vadd.f32 %v1235, %v1236
    %v1238 = vmul.f32 %v969, %v749
    %v1239 = vmul.f32 %v970, %v750
    %v1240 = vmul.f32 %v971, %v751
    %v1241 = vmul.f32 %v972, %v752
    %v1242 = vadd.f32 %v1238, %v1239
    %v1243 = vadd.f32 %v1242, %v1240
    %v1244 = vadd.f32 %v1243, %v1241
    %v1245 = vrot.slane %v1244, 4
    %v1246 = vadd.f32 %v1244, %v1245
    %v1247 = vrot.slane %v1246, 2
    %v1248 = vadd.f32 %v1246, %v1247
    %v1249 = vrot.slane %v1248, 1
    %v1250 = vadd.f32 %v1248, %v1249
    %v1251 = vmul.f32 %v987, %v749
    %v1252 = vmul.f32 %v988, %v750
    %v1253 = vmul.f32 %v989, %v751
    %v1254 = vmul.f32 %v990, %v752
    %v1255 = vadd.f32 %v1251, %v1252
    %v1256 = vadd.f32 %v1255, %v1253
    %v1257 = vadd.f32 %v1256, %v1254
    %v1258 = vrot.slane %v1257, 4
    %v1259 = vadd.f32 %v1257, %v1258
    %v1260 = vrot.slane %v1259, 2
    %v1261 = vadd.f32 %v1259, %v1260
    %v1262 = vrot.slane %v1261, 1
    %v1263 = vadd.f32 %v1261, %v1262
    %v1264 = vmul.f32 %v1005, %v749
    %v1265 = vmul.f32 %v1006, %v750
    %v1266 = vmul.f32 %v1007, %v751
    %v1267 = vmul.f32 %v1008, %v752
    %v1268 = vadd.f32 %v1264, %v1265
    %v1269 = vadd.f32 %v1268, %v1266
    %v1270 = vadd.f32 %v1269, %v1267
    %v1271 = vrot.slane %v1270, 4
    %v1272 = vadd.f32 %v1270, %v1271
    %v1273 = vrot.slane %v1272, 2
    %v1274 = vadd.f32 %v1272, %v1273
    %v1275 = vrot.slane %v1274, 1
    %v1276 = vadd.f32 %v1274, %v1275
    %v1277 = vmul.f32 %v1023, %v749
    %v1278 = vmul.f32 %v1024, %v750
    %v1279 = vmul.f32 %v1025, %v751
    %v1280 = vmul.f32 %v1026, %v752
    %v1281 = vadd.f32 %v1277, %v1278
    %v1282 = vadd.f32 %v1281, %v1279
    %v1283 = vadd.f32 %v1282, %v1280
    %v1284 = vrot.slane %v1283, 4
    %v1285 = vadd.f32 %v1283, %v1284
    %v1286 = vrot.slane %v1285, 2
    %v1287 = vadd.f32 %v1285, %v1286
    %v1288 = vrot.slane %v1287, 1
    %v1289 = vadd.f32 %v1287, %v1288
    %v1290 = vsel %vm1040, %v1094, %v1107
    %v1291 = vsel %vm1042, %v1290, %v1120
    %v1292 = vsel %vm1044, %v1291, %v1133
    %v1293 = vsel %vm1046, %v1292, %v1146
    %v1294 = vsel %vm1048, %v1293, %v1159
    %v1295 = vsel %vm1050, %v1294, %v1172
    %v1296 = vsel %vm1052, %v1295, %v1185
    %v1297 = vsel %vm1040, %v1198, %v1211
    %v1298 = vsel %vm1042, %v1297, %v1224
    %v1299 = vsel %vm1044, %v1298, %v1237
    %v1300 = vsel %vm1046, %v1299, %v1250
    %v1301 = vsel %vm1048, %v1300, %v1263
    %v1302 = vsel %vm1050, %v1301, %v1276
    %v1303 = vsel %vm1052, %v1302, %v1289
    %1304 = vadd.xlane.f32.xlu0 %v1296
    %v1305 = vpop.xlane.xlu0 %1304
    %1306 = vadd.xlane.f32.xlu0 %v1303
    %v1307 = vpop.xlane.xlu0 %1306
    %v1308 = vadd.f32 %v1305, %v1073
    %v1309 = vadd.f32 %v1307, %v1077
    %1312 = vset.pattern.permute.xlu0 0
    %1313 = vperm.xlu0 %1312, %v1080
    %v1314 = vpop.permute.xlu0 %1313
    %1315 = vset.pattern.permute.xlu0 0
    %1316 = vperm.xlu0 %1315, %v1081
    %v1317 = vpop.permute.xlu0 %1316
    %v1318 = vlaneseq
    %v1319 = vshrl.u32 %v1318, 7
    %v1320 = vsub.s32 %v100, %v1319
    %v1321 = vrot.slane %v1314, %v1320
    %v1322 = vadd.s32 %v100, 4294967288
    %v1323 = vlaneseq
    %v1324 = vshrl.u32 %v1323, 7
    %v1325 = vsub.s32 %v1322, %v1324
    %v1326 = vrot.slane %v1317, %v1325
    %vm1327 = vcmask 130112
    %v1328 = vsel %vm1327, %v1326, %v1321
    %1332 = vset.pattern.permute.xlu0 0
    %1333 = vperm.xlu0 %1332, %v1308
    %v1334 = vpop.permute.xlu0 %1333
    %1335 = vset.pattern.permute.xlu0 0
    %1336 = vperm.xlu0 %1335, %v1309
    %v1337 = vpop.permute.xlu0 %1336
    %v1338 = vlaneseq
    %v1339 = vshrl.u32 %v1338, 7
    %v1340 = vsub.s32 %v100, %v1339
    %v1341 = vrot.slane %v1334, %v1340
    %v1342 = vlaneseq
    %v1343 = vshrl.u32 %v1342, 7
    %v1344 = vsub.s32 %v1322, %v1343
    %v1345 = vrot.slane %v1337, %v1344
    %v1346 = vsel %vm1327, %v1345, %v1341
    %v1348 = vsel %vm1040, %v1328, %v1346
    %vm1349 = vcmask 123904
    %1350 = vst.msk [vmem:[#allocation13] sm:$0x3] %vm1349, %v1348
    // Predicated region
    $region46: #{tpu_custom_call.1} parent=1 // pred_check
      _
    $region47: #{tpu_custom_call.1} parent=1 // pred_check_branch
      %1352 = sbr.rel (0) target = $region49
    $region48: #{tpu_custom_call.1} parent=1 // pred_region
      %s1354 = ssub.s32 32, 32
      %1355 = vsyncadd [#allocation6], %s1354
      %s1357 = sshll.u32 [#allocation13], 4
      %s1358 = int_to_ptr.vmem [resolvable:$true] %s1357
      %1360 = dma.vmem_to_hbm [thread:$0]  %s1358, 32, %s7, [#allocation6]
    $region49: #{tpu_custom_call.1} parent=1 // pred_fallthru
      _
    // Predicated region
    $region50: #{tpu_custom_call.1} parent=1 // pred_check
      _
    $region51: #{tpu_custom_call.1} parent=1 // pred_check_branch
      %1362 = sbr.rel (0) target = $region53
    $region52: #{tpu_custom_call.1} parent=1 // pred_region
      %1363 = dma.done [#allocation6], 32
    $region53: #{tpu_custom_call.1} parent=1 // pred_fallthru
      _
    %1364 = vsyncpa [#allocation5], 1
    %1365 = vsyncpa [#allocation12], 1
    %1366 = vsyncpa [#allocation6], 1
    %1367 = vsyncpa [#allocation7], 1
    %1368 = vsyncpa [#allocation10], 1

</llo_original>
